<compile_context>
chip_gen: v6e
topology: v6e:2x2x1
jax: 0.10.0
libtpu: 0.0.40
codegen_flags: <defaults>
</compile_context>

<pallas_src>
import functools

import jax
import jax.numpy as jnp
from jax import lax
from jax.experimental import pallas as pl
from jax.experimental.pallas import tpu as pltpu

LANE = 128
NEG = -1e30  # padded logit columns -> exp() underflows to exactly 0

_GATE_ORDER = (0, 1, 3, 2)  # PyTorch rows [i, f, g, o] -> packed columns [i, f, o, g]


def _round_up(x, m):
    return ((x + m - 1) // m) * m


# ------------------- fused LSTM stack + FC + LogSoftmax kernel ----------------
def _lstm_net_kernel(x_ref, *refs, seq_len, batch, nb_layer, hidden):
    """Grid-less fused forward.

    x_ref            : (S*B, in_size) bf16, time-major rows [t0b0, t0b1, t1b0, ...]
    per layer l      : wih (IN_l, 4H) bf16, whh (H, 4H) bf16, b (1, 4H) f32
                       (gate column order [i, f, o, g], each H lanes wide)
    wfc_ref, bfc_ref : (H, CP) f32, (1, CP) f32 (padded logit cols biased -1e30)
    out_ref, hn_ref  : (B, CP) f32 log-probs, (L, B, H) f32 final hidden states
    y_scr            : (S*B, H) f32 scratch holding a layer's full output sequence
    """
    H, B, S = hidden, batch, seq_len
    wih = [refs[3 * l] for l in range(nb_layer)]
    whh = [refs[3 * l + 1] for l in range(nb_layer)]
    bs = [refs[3 * l + 2] for l in range(nb_layer)]
    n = 3 * nb_layer
    wfc_ref, bfc_ref = refs[n], refs[n + 1]
    out_ref, hn_ref = refs[n + 2], refs[n + 3]
    y_scr = refs[n + 4]

    y = x_ref[...]                                     # (S*B, IN_0) bf16
    h = None
    for l in range(nb_layer):                          # layers unrolled at trace time
        # Hoisted input->hidden projection for ALL timesteps: one MXU matmul,
        # bias folded in here (not re-broadcast / re-added inside the loop).
        xg = jnp.dot(y, wih[l][...],
                     preferred_element_type=jnp.float32) + bs[l][...]   # (S*B, 4H) f32
        w_hh = whh[l][...]                             # (H, 4H) bf16, loop-invariant
        h = jnp.zeros((B, H), jnp.float32)
        c = jnp.zeros((B, H), jnp.float32)
        last = (l == nb_layer - 1)
        for t in range(S):                             # trace-time unrolled (S*L = 16 cells)
            # Serial critical path: one (B,H)x(H,4H) bf16 MXU tile + VPU/EUP cell.
            gates = xg[t * B:(t + 1) * B, :] + jnp.dot(
                h.astype(jnp.bfloat16), w_hh, preferred_element_type=jnp.float32)
            sig = jax.nn.sigmoid(gates)                # one EUP chain covers i, f, o
            tnh = jnp.tanh(gates)                      # one EUP chain covers g
            i_g = sig[:, 0 * H:1 * H]                  # lane slices -> XLU rotates
            f_g = sig[:, 1 * H:2 * H]
            o_g = sig[:, 2 * H:3 * H]
            g_g = tnh[:, 3 * H:4 * H]
            c = f_g * c + i_g * g_g
            h = o_g * jnp.tanh(c)
            if not last:                               # next layer needs the whole sequence
                y_scr[t * B:(t + 1) * B, :] = h
        hn_ref[l] = h                                  # written once per layer, not per step
        if not last:
            y = y_scr[...].astype(jnp.bfloat16)        # (S*B, H) input to next layer

    # FC + LogSoftmax on out[-1, :, :] == last layer's final hidden state (f32 path).
    logits = jnp.dot(h, wfc_ref[...],
                     preferred_element_type=jnp.float32) + bfc_ref[...]  # (B, CP)
    m = jnp.max(logits, axis=1, keepdims=True)
    lse = m + jnp.log(jnp.sum(jnp.exp(logits - m), axis=1, keepdims=True))
    out_ref[...] = logits - lse


# ------------------------------ parameter packing -----------------------------
def _pack_lstm_layer(w_ih, w_hh, b_ih, b_hh):
    """PyTorch-layout params -> tight packed (IN,4H)/(H,4H) bf16 weights, (1,4H) f32 bias.

    Gate column order is [i, f, o, g] (sigmoid gates first, tanh gate last).
    """
    four_h, in_dim = w_ih.shape
    h = four_h // 4
    Wih = jnp.zeros((in_dim, 4 * h), jnp.float32)
    Whh = jnp.zeros((h, 4 * h), jnp.float32)
    b = jnp.zeros((1, 4 * h), jnp.float32)
    for k_out, k_t in enumerate(_GATE_ORDER):
        Wih = Wih.at[:, k_out * h:(k_out + 1) * h].set(w_ih[k_t * h:(k_t + 1) * h, :].T)
        Whh = Whh.at[:, k_out * h:(k_out + 1) * h].set(w_hh[k_t * h:(k_t + 1) * h, :].T)
        b = b.at[0, k_out * h:(k_out + 1) * h].set(
            b_ih[k_t * h:(k_t + 1) * h] + b_hh[k_t * h:(k_t + 1) * h])
    return Wih.astype(jnp.bfloat16), Whh.astype(jnp.bfloat16), b


def _pack_fc(w_fc, b_fc, cp):
    c, h = w_fc.shape
    W = jnp.zeros((h, cp), jnp.float32).at[:, :c].set(w_fc.T)
    b = jnp.full((1, cp), NEG, jnp.float32).at[0, :c].set(b_fc)
    return W, b


def init_params(key, in_size, hidden_size, nb_layer, nb_classes):
    """PyTorch-style uniform(-1/sqrt(H), 1/sqrt(H)) init, packed once."""
    cp = _round_up(nb_classes, LANE)
    k = 1.0 / jnp.sqrt(jnp.float32(hidden_size))

    params = {"lstm": [], "fc": None, "raw": {"lstm": [], "fc": None},
              "in_size": in_size, "hidden_size": hidden_size,
              "nb_layer": nb_layer, "nb_classes": nb_classes, "cp": cp}

    for layer in range(nb_layer):
        layer_in = in_size if layer == 0 else hidden_size
        key, k1, k2, k3, k4 = jax.random.split(key, 5)
        w_ih = jax.random.uniform(k1, (4 * hidden_size, layer_in), jnp.float32, -k, k)
        w_hh = jax.random.uniform(k2, (4 * hidden_size, hidden_size), jnp.float32, -k, k)
        b_ih = jax.random.uniform(k3, (4 * hidden_size,), jnp.float32, -k, k)
        b_hh = jax.random.uniform(k4, (4 * hidden_size,), jnp.float32, -k, k)
        Wih, Whh, b = _pack_lstm_layer(w_ih, w_hh, b_ih, b_hh)
        params["lstm"].append({"w_ih": Wih, "w_hh": Whh, "b": b})
        params["raw"]["lstm"].append({"w_ih": w_ih, "w_hh": w_hh,
                                      "b_ih": b_ih, "b_hh": b_hh})

    key, k5, k6 = jax.random.split(key, 3)
    w_fc = jax.random.uniform(k5, (nb_classes, hidden_size), jnp.float32, -k, k)
    b_fc = jax.random.uniform(k6, (nb_classes,), jnp.float32, -k, k)
    Wfc, bfc = _pack_fc(w_fc, b_fc, cp)
    params["fc"] = {"w": Wfc, "b": bfc}
    params["raw"]["fc"] = {"w": w_fc, "b": b_fc}
    return params


# --------------------------------- forward ------------------------------------
def lstm_net_forward(params, x):
    """x: (S, B, in_size) f32 -> (log_probs (B, C), hn (nb_layer, B, H))."""
    S, B, I = x.shape
    H, C, L = params["hidden_size"], params["nb_classes"], params["nb_layer"]
    CP = params["cp"]

    # Time-major flatten; bf16 halves the input DMA and matches the MXU path.
    x_flat = x.reshape(S * B, I).astype(jnp.bfloat16)

    inputs = [x_flat]
    for lw in params["lstm"]:
        inputs += [lw["w_ih"], lw["w_hh"], lw["b"]]
    inputs += [params["fc"]["w"], params["fc"]["b"]]

    # Advisory cost estimate so XLA schedules sensibly around the custom call.
    flops = 2 * B * H * CP
    trans = B * CP
    for l in range(L):
        in_dim = I if l == 0 else H
        flops += 2 * S * B * in_dim * 4 * H          # hoisted input projection
        flops += 2 * S * B * H * 4 * H               # recurrent matmuls
        trans += S * (2 * B * 4 * H + B * H)         # sigmoid(gates)+tanh(gates)+tanh(c)
    bytes_accessed = sum(int(a.size) * a.dtype.itemsize for a in inputs)
    bytes_accessed += B * CP * 4 + L * B * H * 4

    out_pad, hn = pl.pallas_call(
        functools.partial(_lstm_net_kernel, seq_len=S, batch=B, nb_layer=L, hidden=H),
        out_shape=(jax.ShapeDtypeStruct((B, CP), jnp.float32),
                   jax.ShapeDtypeStruct((L, B, H), jnp.float32)),
        in_specs=[pl.BlockSpec(memory_space=pltpu.MemorySpace.VMEM)] * len(inputs),
        out_specs=(pl.BlockSpec(memory_space=pltpu.MemorySpace.VMEM),
                   pl.BlockSpec(memory_space=pltpu.MemorySpace.VMEM)),
        scratch_shapes=[pltpu.VMEM((S * B, H), jnp.float32)],
        cost_estimate=pl.CostEstimate(flops=flops, transcendentals=trans,
                                      bytes_accessed=bytes_accessed),
    )(*inputs)

    return out_pad[:, :C], hn


# ------------------------------ pure-JAX reference -----------------------------
def _reference_forward(params, x):
    """Mirror of torch.nn.LSTM(batch_first=False) + Linear + LogSoftmax (f32, HIGHEST)."""
    S, B, _ = x.shape
    H = params["hidden_size"]
    hi = lax.Precision.HIGHEST
    y = x
    hn = []
    for lp in params["raw"]["lstm"]:
        w_ih, w_hh = lp["w_ih"], lp["w_hh"]
        b = lp["b_ih"] + lp["b_hh"]
        h = jnp.zeros((B, H), jnp.float32)
        c = jnp.zeros((B, H), jnp.float32)
        outs = []
        for t in range(S):
            g = (jnp.dot(y[t], w_ih.T, precision=hi)
                 + jnp.dot(h, w_hh.T, precision=hi) + b)
            i = jax.nn.sigmoid(g[:, 0 * H:1 * H])
            f = jax.nn.sigmoid(g[:, 1 * H:2 * H])
            gg = jnp.tanh(g[:, 2 * H:3 * H])
            o = jax.nn.sigmoid(g[:, 3 * H:4 * H])
            c = f * c + i * gg
            h = o * jnp.tanh(c)
            outs.append(h)
        y = jnp.stack(outs, axis=0)
        hn.append(h)
    logits = (jnp.dot(y[-1], params["raw"]["fc"]["w"].T, precision=hi)
              + params["raw"]["fc"]["b"])
    return jax.nn.log_softmax(logits, axis=1), jnp.stack(hn, axis=0)


if __name__ == "__main__":
    SEQ, BATCH, IN_SIZE, HIDDEN, NB_LAYER, NB_CLASSES = 8, 2, 16, 32, 2, 10

    key = jax.random.PRNGKey(0)
    key, kx, kp = jax.random.split(key, 3)
    x = jax.random.normal(kx, (SEQ, BATCH, IN_SIZE), dtype=jnp.float32)
    params = init_params(kp, IN_SIZE, HIDDEN, NB_LAYER, NB_CLASSES)

    log_probs, hn = lstm_net_forward(params, x)
    jax.block_until_ready((log_probs, hn))

    assert log_probs.shape == (BATCH, NB_CLASSES)
    assert hn.shape == (NB_LAYER, BATCH, HIDDEN)

    # Numerical check vs. a pure-JAX f32 (HIGHEST precision) reference of the
    # PyTorch module.  The kernel uses bf16 MXU operands on the recurrent path
    # (per the perf review), so allow ~1e-2 drift over the S=8 recurrence.
    ref_lp, ref_hn = _reference_forward(params, x)
    assert float(jnp.max(jnp.abs(log_probs - ref_lp))) < 1e-2
    assert float(jnp.max(jnp.abs(hn - ref_hn))) < 1e-2

    print("KERNEL_OK")
</pallas_src>

<mosaic_0001>
module attributes {stable_mosaic.version = 11 : i64} {
  func.func @_lstm_net_kernel(%arg0: memref<16x16xbf16, #tpu.memory_space<vmem>>, %arg1: memref<16x128xbf16, #tpu.memory_space<vmem>>, %arg2: memref<32x128xbf16, #tpu.memory_space<vmem>>, %arg3: memref<1x128xf32, #tpu.memory_space<vmem>>, %arg4: memref<32x128xbf16, #tpu.memory_space<vmem>>, %arg5: memref<32x128xbf16, #tpu.memory_space<vmem>>, %arg6: memref<1x128xf32, #tpu.memory_space<vmem>>, %arg7: memref<32x128xf32, #tpu.memory_space<vmem>>, %arg8: memref<1x128xf32, #tpu.memory_space<vmem>>, %arg9: memref<2x128xf32, #tpu.memory_space<vmem>>, %arg10: memref<2x2x32xf32, #tpu.memory_space<vmem>>, %arg11: memref<16x32xf32, #tpu.memory_space<vmem>>) attributes {dimension_semantics = [], scalar_prefetch = 0 : i64, scratch_operands = 1 : i64, tpu.core_type = #tpu.core_type<tc>} {
    %c0 = arith.constant 0 : index
    %c0_0 = arith.constant 0 : index
    %0 = vector.load %arg0[%c0, %c0_0] : memref<16x16xbf16, #tpu.memory_space<vmem>>, vector<16x16xbf16>
    %c0_1 = arith.constant 0 : index
    %c0_2 = arith.constant 0 : index
    %1 = vector.load %arg1[%c0_1, %c0_2] : memref<16x128xbf16, #tpu.memory_space<vmem>>, vector<16x128xbf16>
    %cst = arith.constant dense<0.000000e+00> : vector<16x128xf32>
    %2 = tpu.matmul %0, %1, %cst {dimension_numbers = #tpu.dot_dimension_numbers<[1], [0], [0], [1], [0, 0, 1, 1], [], []>} : vector<16x16xbf16>, vector<16x128xbf16>, vector<16x128xf32> -> vector<16x128xf32>
    %c0_3 = arith.constant 0 : index
    %c0_4 = arith.constant 0 : index
    %3 = vector.load %arg3[%c0_3, %c0_4] : memref<1x128xf32, #tpu.memory_space<vmem>>, vector<1x128xf32>
    %4 = vector.broadcast %3 : vector<1x128xf32> to vector<16x128xf32>
    %5 = arith.addf %2, %4 : vector<16x128xf32>
    %c0_5 = arith.constant 0 : index
    %c0_6 = arith.constant 0 : index
    %6 = vector.load %arg2[%c0_5, %c0_6] : memref<32x128xbf16, #tpu.memory_space<vmem>>, vector<32x128xbf16>
    %cst_7 = arith.constant 0.000000e+00 : f32
    %7 = vector.broadcast %cst_7 : f32 to vector<2x32xf32>
    %cst_8 = arith.constant 0.000000e+00 : f32
    %8 = vector.broadcast %cst_8 : f32 to vector<2x32xf32>
    %9 = vector.extract_strided_slice %5 {offsets = [0, 0], sizes = [2, 128], strides = [1, 1]} : vector<16x128xf32> to vector<2x128xf32>
    %10 = arith.truncf %7 : vector<2x32xf32> to vector<2x32xbf16>
    %cst_9 = arith.constant dense<0.000000e+00> : vector<2x128xf32>
    %11 = tpu.matmul %10, %6, %cst_9 {dimension_numbers = #tpu.dot_dimension_numbers<[1], [0], [0], [1], [0, 0, 1, 1], [], []>} : vector<2x32xbf16>, vector<32x128xbf16>, vector<2x128xf32> -> vector<2x128xf32>
    %12 = arith.addf %9, %11 : vector<2x128xf32>
    %13 = arith.negf %12 : vector<2x128xf32>
    %14 = math.exp %13 : vector<2x128xf32>
    %cst_10 = arith.constant 1.000000e+00 : f32
    %15 = vector.broadcast %cst_10 : f32 to vector<2x128xf32>
    %16 = arith.addf %15, %14 : vector<2x128xf32>
    %17 = arith.divf %15, %16 : vector<2x128xf32>
    %18 = math.tanh %12 : vector<2x128xf32>
    %19 = vector.extract_strided_slice %17 {offsets = [0, 0], sizes = [2, 32], strides = [1, 1]} : vector<2x128xf32> to vector<2x32xf32>
    %20 = vector.extract_strided_slice %17 {offsets = [0, 32], sizes = [2, 32], strides = [1, 1]} : vector<2x128xf32> to vector<2x32xf32>
    %21 = vector.extract_strided_slice %17 {offsets = [0, 64], sizes = [2, 32], strides = [1, 1]} : vector<2x128xf32> to vector<2x32xf32>
    %22 = vector.extract_strided_slice %18 {offsets = [0, 96], sizes = [2, 32], strides = [1, 1]} : vector<2x128xf32> to vector<2x32xf32>
    %23 = arith.mulf %20, %8 : vector<2x32xf32>
    %24 = arith.mulf %19, %22 : vector<2x32xf32>
    %25 = arith.addf %23, %24 : vector<2x32xf32>
    %26 = math.tanh %25 : vector<2x32xf32>
    %27 = arith.mulf %21, %26 : vector<2x32xf32>
    %c0_11 = arith.constant 0 : index
    %c0_12 = arith.constant 0 : index
    %28 = vector.load %arg11[%c0_11, %c0_12] : memref<16x32xf32, #tpu.memory_space<vmem>>, vector<2x32xf32>
    tpu.vector_store %arg11[%c0_11, %c0_12], %27 {strides = array<i32>} : memref<16x32xf32, #tpu.memory_space<vmem>>, vector<2x32xf32>,
    %29 = vector.extract_strided_slice %5 {offsets = [2, 0], sizes = [2, 128], strides = [1, 1]} : vector<16x128xf32> to vector<2x128xf32>
    %30 = arith.truncf %27 : vector<2x32xf32> to vector<2x32xbf16>
    %cst_13 = arith.constant dense<0.000000e+00> : vector<2x128xf32>
    %31 = tpu.matmul %30, %6, %cst_13 {dimension_numbers = #tpu.dot_dimension_numbers<[1], [0], [0], [1], [0, 0, 1, 1], [], []>} : vector<2x32xbf16>, vector<32x128xbf16>, vector<2x128xf32> -> vector<2x128xf32>
    %32 = arith.addf %29, %31 : vector<2x128xf32>
    %33 = arith.negf %32 : vector<2x128xf32>
    %34 = math.exp %33 : vector<2x128xf32>
    %cst_14 = arith.constant 1.000000e+00 : f32
    %35 = vector.broadcast %cst_14 : f32 to vector<2x128xf32>
    %36 = arith.addf %35, %34 : vector<2x128xf32>
    %37 = arith.divf %35, %36 : vector<2x128xf32>
    %38 = math.tanh %32 : vector<2x128xf32>
    %39 = vector.extract_strided_slice %37 {offsets = [0, 0], sizes = [2, 32], strides = [1, 1]} : vector<2x128xf32> to vector<2x32xf32>
    %40 = vector.extract_strided_slice %37 {offsets = [0, 32], sizes = [2, 32], strides = [1, 1]} : vector<2x128xf32> to vector<2x32xf32>
    %41 = vector.extract_strided_slice %37 {offsets = [0, 64], sizes = [2, 32], strides = [1, 1]} : vector<2x128xf32> to vector<2x32xf32>
    %42 = vector.extract_strided_slice %38 {offsets = [0, 96], sizes = [2, 32], strides = [1, 1]} : vector<2x128xf32> to vector<2x32xf32>
    %43 = arith.mulf %40, %25 : vector<2x32xf32>
    %44 = arith.mulf %39, %42 : vector<2x32xf32>
    %45 = arith.addf %43, %44 : vector<2x32xf32>
    %46 = math.tanh %45 : vector<2x32xf32>
    %47 = arith.mulf %41, %46 : vector<2x32xf32>
    %c2 = arith.constant 2 : index
    %c0_15 = arith.constant 0 : index
    %48 = vector.load %arg11[%c2, %c0_15] : memref<16x32xf32, #tpu.memory_space<vmem>>, vector<2x32xf32>
    tpu.vector_store %arg11[%c2, %c0_15], %47 {strides = array<i32>} : memref<16x32xf32, #tpu.memory_space<vmem>>, vector<2x32xf32>,
    %49 = vector.extract_strided_slice %5 {offsets = [4, 0], sizes = [2, 128], strides = [1, 1]} : vector<16x128xf32> to vector<2x128xf32>
    %50 = arith.truncf %47 : vector<2x32xf32> to vector<2x32xbf16>
    %cst_16 = arith.constant dense<0.000000e+00> : vector<2x128xf32>
    %51 = tpu.matmul %50, %6, %cst_16 {dimension_numbers = #tpu.dot_dimension_numbers<[1], [0], [0], [1], [0, 0, 1, 1], [], []>} : vector<2x32xbf16>, vector<32x128xbf16>, vector<2x128xf32> -> vector<2x128xf32>
    %52 = arith.addf %49, %51 : vector<2x128xf32>
    %53 = arith.negf %52 : vector<2x128xf32>
    %54 = math.exp %53 : vector<2x128xf32>
    %cst_17 = arith.constant 1.000000e+00 : f32
    %55 = vector.broadcast %cst_17 : f32 to vector<2x128xf32>
    %56 = arith.addf %55, %54 : vector<2x128xf32>
    %57 = arith.divf %55, %56 : vector<2x128xf32>
    %58 = math.tanh %52 : vector<2x128xf32>
    %59 = vector.extract_strided_slice %57 {offsets = [0, 0], sizes = [2, 32], strides = [1, 1]} : vector<2x128xf32> to vector<2x32xf32>
    %60 = vector.extract_strided_slice %57 {offsets = [0, 32], sizes = [2, 32], strides = [1, 1]} : vector<2x128xf32> to vector<2x32xf32>
    %61 = vector.extract_strided_slice %57 {offsets = [0, 64], sizes = [2, 32], strides = [1, 1]} : vector<2x128xf32> to vector<2x32xf32>
    %62 = vector.extract_strided_slice %58 {offsets = [0, 96], sizes = [2, 32], strides = [1, 1]} : vector<2x128xf32> to vector<2x32xf32>
    %63 = arith.mulf %60, %45 : vector<2x32xf32>
    %64 = arith.mulf %59, %62 : vector<2x32xf32>
    %65 = arith.addf %63, %64 : vector<2x32xf32>
    %66 = math.tanh %65 : vector<2x32xf32>
    %67 = arith.mulf %61, %66 : vector<2x32xf32>
    %c4 = arith.constant 4 : index
    %c0_18 = arith.constant 0 : index
    %68 = vector.load %arg11[%c4, %c0_18] : memref<16x32xf32, #tpu.memory_space<vmem>>, vector<2x32xf32>
    tpu.vector_store %arg11[%c4, %c0_18], %67 {strides = array<i32>} : memref<16x32xf32, #tpu.memory_space<vmem>>, vector<2x32xf32>,
    %69 = vector.extract_strided_slice %5 {offsets = [6, 0], sizes = [2, 128], strides = [1, 1]} : vector<16x128xf32> to vector<2x128xf32>
    %70 = arith.truncf %67 : vector<2x32xf32> to vector<2x32xbf16>
    %cst_19 = arith.constant dense<0.000000e+00> : vector<2x128xf32>
    %71 = tpu.matmul %70, %6, %cst_19 {dimension_numbers = #tpu.dot_dimension_numbers<[1], [0], [0], [1], [0, 0, 1, 1], [], []>} : vector<2x32xbf16>, vector<32x128xbf16>, vector<2x128xf32> -> vector<2x128xf32>
    %72 = arith.addf %69, %71 : vector<2x128xf32>
    %73 = arith.negf %72 : vector<2x128xf32>
    %74 = math.exp %73 : vector<2x128xf32>
    %cst_20 = arith.constant 1.000000e+00 : f32
    %75 = vector.broadcast %cst_20 : f32 to vector<2x128xf32>
    %76 = arith.addf %75, %74 : vector<2x128xf32>
    %77 = arith.divf %75, %76 : vector<2x128xf32>
    %78 = math.tanh %72 : vector<2x128xf32>
    %79 = vector.extract_strided_slice %77 {offsets = [0, 0], sizes = [2, 32], strides = [1, 1]} : vector<2x128xf32> to vector<2x32xf32>
    %80 = vector.extract_strided_slice %77 {offsets = [0, 32], sizes = [2, 32], strides = [1, 1]} : vector<2x128xf32> to vector<2x32xf32>
    %81 = vector.extract_strided_slice %77 {offsets = [0, 64], sizes = [2, 32], strides = [1, 1]} : vector<2x128xf32> to vector<2x32xf32>
    %82 = vector.extract_strided_slice %78 {offsets = [0, 96], sizes = [2, 32], strides = [1, 1]} : vector<2x128xf32> to vector<2x32xf32>
    %83 = arith.mulf %80, %65 : vector<2x32xf32>
    %84 = arith.mulf %79, %82 : vector<2x32xf32>
    %85 = arith.addf %83, %84 : vector<2x32xf32>
    %86 = math.tanh %85 : vector<2x32xf32>
    %87 = arith.mulf %81, %86 : vector<2x32xf32>
    %c6 = arith.constant 6 : index
    %c0_21 = arith.constant 0 : index
    %88 = vector.load %arg11[%c6, %c0_21] : memref<16x32xf32, #tpu.memory_space<vmem>>, vector<2x32xf32>
    tpu.vector_store %arg11[%c6, %c0_21], %87 {strides = array<i32>} : memref<16x32xf32, #tpu.memory_space<vmem>>, vector<2x32xf32>,
    %89 = vector.extract_strided_slice %5 {offsets = [8, 0], sizes = [2, 128], strides = [1, 1]} : vector<16x128xf32> to vector<2x128xf32>
    %90 = arith.truncf %87 : vector<2x32xf32> to vector<2x32xbf16>
    %cst_22 = arith.constant dense<0.000000e+00> : vector<2x128xf32>
    %91 = tpu.matmul %90, %6, %cst_22 {dimension_numbers = #tpu.dot_dimension_numbers<[1], [0], [0], [1], [0, 0, 1, 1], [], []>} : vector<2x32xbf16>, vector<32x128xbf16>, vector<2x128xf32> -> vector<2x128xf32>
    %92 = arith.addf %89, %91 : vector<2x128xf32>
    %93 = arith.negf %92 : vector<2x128xf32>
    %94 = math.exp %93 : vector<2x128xf32>
    %cst_23 = arith.constant 1.000000e+00 : f32
    %95 = vector.broadcast %cst_23 : f32 to vector<2x128xf32>
    %96 = arith.addf %95, %94 : vector<2x128xf32>
    %97 = arith.divf %95, %96 : vector<2x128xf32>
    %98 = math.tanh %92 : vector<2x128xf32>
    %99 = vector.extract_strided_slice %97 {offsets = [0, 0], sizes = [2, 32], strides = [1, 1]} : vector<2x128xf32> to vector<2x32xf32>
    %100 = vector.extract_strided_slice %97 {offsets = [0, 32], sizes = [2, 32], strides = [1, 1]} : vector<2x128xf32> to vector<2x32xf32>
    %101 = vector.extract_strided_slice %97 {offsets = [0, 64], sizes = [2, 32], strides = [1, 1]} : vector<2x128xf32> to vector<2x32xf32>
    %102 = vector.extract_strided_slice %98 {offsets = [0, 96], sizes = [2, 32], strides = [1, 1]} : vector<2x128xf32> to vector<2x32xf32>
    %103 = arith.mulf %100, %85 : vector<2x32xf32>
    %104 = arith.mulf %99, %102 : vector<2x32xf32>
    %105 = arith.addf %103, %104 : vector<2x32xf32>
    %106 = math.tanh %105 : vector<2x32xf32>
    %107 = arith.mulf %101, %106 : vector<2x32xf32>
    %c8 = arith.constant 8 : index
    %c0_24 = arith.constant 0 : index
    %108 = vector.load %arg11[%c8, %c0_24] : memref<16x32xf32, #tpu.memory_space<vmem>>, vector<2x32xf32>
    tpu.vector_store %arg11[%c8, %c0_24], %107 {strides = array<i32>} : memref<16x32xf32, #tpu.memory_space<vmem>>, vector<2x32xf32>,
    %109 = vector.extract_strided_slice %5 {offsets = [10, 0], sizes = [2, 128], strides = [1, 1]} : vector<16x128xf32> to vector<2x128xf32>
    %110 = arith.truncf %107 : vector<2x32xf32> to vector<2x32xbf16>
    %cst_25 = arith.constant dense<0.000000e+00> : vector<2x128xf32>
    %111 = tpu.matmul %110, %6, %cst_25 {dimension_numbers = #tpu.dot_dimension_numbers<[1], [0], [0], [1], [0, 0, 1, 1], [], []>} : vector<2x32xbf16>, vector<32x128xbf16>, vector<2x128xf32> -> vector<2x128xf32>
    %112 = arith.addf %109, %111 : vector<2x128xf32>
    %113 = arith.negf %112 : vector<2x128xf32>
    %114 = math.exp %113 : vector<2x128xf32>
    %cst_26 = arith.constant 1.000000e+00 : f32
    %115 = vector.broadcast %cst_26 : f32 to vector<2x128xf32>
    %116 = arith.addf %115, %114 : vector<2x128xf32>
    %117 = arith.divf %115, %116 : vector<2x128xf32>
    %118 = math.tanh %112 : vector<2x128xf32>
    %119 = vector.extract_strided_slice %117 {offsets = [0, 0], sizes = [2, 32], strides = [1, 1]} : vector<2x128xf32> to vector<2x32xf32>
    %120 = vector.extract_strided_slice %117 {offsets = [0, 32], sizes = [2, 32], strides = [1, 1]} : vector<2x128xf32> to vector<2x32xf32>
    %121 = vector.extract_strided_slice %117 {offsets = [0, 64], sizes = [2, 32], strides = [1, 1]} : vector<2x128xf32> to vector<2x32xf32>
    %122 = vector.extract_strided_slice %118 {offsets = [0, 96], sizes = [2, 32], strides = [1, 1]} : vector<2x128xf32> to vector<2x32xf32>
    %123 = arith.mulf %120, %105 : vector<2x32xf32>
    %124 = arith.mulf %119, %122 : vector<2x32xf32>
    %125 = arith.addf %123, %124 : vector<2x32xf32>
    %126 = math.tanh %125 : vector<2x32xf32>
    %127 = arith.mulf %121, %126 : vector<2x32xf32>
    %c10 = arith.constant 10 : index
    %c0_27 = arith.constant 0 : index
    %128 = vector.load %arg11[%c10, %c0_27] : memref<16x32xf32, #tpu.memory_space<vmem>>, vector<2x32xf32>
    tpu.vector_store %arg11[%c10, %c0_27], %127 {strides = array<i32>} : memref<16x32xf32, #tpu.memory_space<vmem>>, vector<2x32xf32>,
    %129 = vector.extract_strided_slice %5 {offsets = [12, 0], sizes = [2, 128], strides = [1, 1]} : vector<16x128xf32> to vector<2x128xf32>
    %130 = arith.truncf %127 : vector<2x32xf32> to vector<2x32xbf16>
    %cst_28 = arith.constant dense<0.000000e+00> : vector<2x128xf32>
    %131 = tpu.matmul %130, %6, %cst_28 {dimension_numbers = #tpu.dot_dimension_numbers<[1], [0], [0], [1], [0, 0, 1, 1], [], []>} : vector<2x32xbf16>, vector<32x128xbf16>, vector<2x128xf32> -> vector<2x128xf32>
    %132 = arith.addf %129, %131 : vector<2x128xf32>
    %133 = arith.negf %132 : vector<2x128xf32>
    %134 = math.exp %133 : vector<2x128xf32>
    %cst_29 = arith.constant 1.000000e+00 : f32
    %135 = vector.broadcast %cst_29 : f32 to vector<2x128xf32>
    %136 = arith.addf %135, %134 : vector<2x128xf32>
    %137 = arith.divf %135, %136 : vector<2x128xf32>
    %138 = math.tanh %132 : vector<2x128xf32>
    %139 = vector.extract_strided_slice %137 {offsets = [0, 0], sizes = [2, 32], strides = [1, 1]} : vector<2x128xf32> to vector<2x32xf32>
    %140 = vector.extract_strided_slice %137 {offsets = [0, 32], sizes = [2, 32], strides = [1, 1]} : vector<2x128xf32> to vector<2x32xf32>
    %141 = vector.extract_strided_slice %137 {offsets = [0, 64], sizes = [2, 32], strides = [1, 1]} : vector<2x128xf32> to vector<2x32xf32>
    %142 = vector.extract_strided_slice %138 {offsets = [0, 96], sizes = [2, 32], strides = [1, 1]} : vector<2x128xf32> to vector<2x32xf32>
    %143 = arith.mulf %140, %125 : vector<2x32xf32>
    %144 = arith.mulf %139, %142 : vector<2x32xf32>
    %145 = arith.addf %143, %144 : vector<2x32xf32>
    %146 = math.tanh %145 : vector<2x32xf32>
    %147 = arith.mulf %141, %146 : vector<2x32xf32>
    %c12 = arith.constant 12 : index
    %c0_30 = arith.constant 0 : index
    %148 = vector.load %arg11[%c12, %c0_30] : memref<16x32xf32, #tpu.memory_space<vmem>>, vector<2x32xf32>
    tpu.vector_store %arg11[%c12, %c0_30], %147 {strides = array<i32>} : memref<16x32xf32, #tpu.memory_space<vmem>>, vector<2x32xf32>,
    %149 = vector.extract_strided_slice %5 {offsets = [14, 0], sizes = [2, 128], strides = [1, 1]} : vector<16x128xf32> to vector<2x128xf32>
    %150 = arith.truncf %147 : vector<2x32xf32> to vector<2x32xbf16>
    %cst_31 = arith.constant dense<0.000000e+00> : vector<2x128xf32>
    %151 = tpu.matmul %150, %6, %cst_31 {dimension_numbers = #tpu.dot_dimension_numbers<[1], [0], [0], [1], [0, 0, 1, 1], [], []>} : vector<2x32xbf16>, vector<32x128xbf16>, vector<2x128xf32> -> vector<2x128xf32>
    %152 = arith.addf %149, %151 : vector<2x128xf32>
    %153 = arith.negf %152 : vector<2x128xf32>
    %154 = math.exp %153 : vector<2x128xf32>
    %cst_32 = arith.constant 1.000000e+00 : f32
    %155 = vector.broadcast %cst_32 : f32 to vector<2x128xf32>
    %156 = arith.addf %155, %154 : vector<2x128xf32>
    %157 = arith.divf %155, %156 : vector<2x128xf32>
    %158 = math.tanh %152 : vector<2x128xf32>
    %159 = vector.extract_strided_slice %157 {offsets = [0, 0], sizes = [2, 32], strides = [1, 1]} : vector<2x128xf32> to vector<2x32xf32>
    %160 = vector.extract_strided_slice %157 {offsets = [0, 32], sizes = [2, 32], strides = [1, 1]} : vector<2x128xf32> to vector<2x32xf32>
    %161 = vector.extract_strided_slice %157 {offsets = [0, 64], sizes = [2, 32], strides = [1, 1]} : vector<2x128xf32> to vector<2x32xf32>
    %162 = vector.extract_strided_slice %158 {offsets = [0, 96], sizes = [2, 32], strides = [1, 1]} : vector<2x128xf32> to vector<2x32xf32>
    %163 = arith.mulf %160, %145 : vector<2x32xf32>
    %164 = arith.mulf %159, %162 : vector<2x32xf32>
    %165 = arith.addf %163, %164 : vector<2x32xf32>
    %166 = math.tanh %165 : vector<2x32xf32>
    %167 = arith.mulf %161, %166 : vector<2x32xf32>
    %c14 = arith.constant 14 : index
    %c0_33 = arith.constant 0 : index
    %168 = vector.load %arg11[%c14, %c0_33] : memref<16x32xf32, #tpu.memory_space<vmem>>, vector<2x32xf32>
    tpu.vector_store %arg11[%c14, %c0_33], %167 {strides = array<i32>} : memref<16x32xf32, #tpu.memory_space<vmem>>, vector<2x32xf32>,
    %c0_34 = arith.constant 0 : index
    %c0_35 = arith.constant 0 : index
    %c0_36 = arith.constant 0 : index
    %169 = vector.load %arg10[%c0_34, %c0_35, %c0_36] : memref<2x2x32xf32, #tpu.memory_space<vmem>>, vector<1x2x32xf32>
    %170 = vector.shape_cast %169 : vector<1x2x32xf32> to vector<2x32xf32>
    %171 = vector.shape_cast %167 : vector<2x32xf32> to vector<1x2x32xf32>
    tpu.vector_store %arg10[%c0_34, %c0_35, %c0_36], %171 {strides = array<i32>} : memref<2x2x32xf32, #tpu.memory_space<vmem>>, vector<1x2x32xf32>,
    %c0_37 = arith.constant 0 : index
    %c0_38 = arith.constant 0 : index
    %172 = vector.load %arg11[%c0_37, %c0_38] : memref<16x32xf32, #tpu.memory_space<vmem>>, vector<16x32xf32>
    %173 = arith.truncf %172 : vector<16x32xf32> to vector<16x32xbf16>
    %c0_39 = arith.constant 0 : index
    %c0_40 = arith.constant 0 : index
    %174 = vector.load %arg4[%c0_39, %c0_40] : memref<32x128xbf16, #tpu.memory_space<vmem>>, vector<32x128xbf16>
    %cst_41 = arith.constant dense<0.000000e+00> : vector<16x128xf32>
    %175 = tpu.matmul %173, %174, %cst_41 {dimension_numbers = #tpu.dot_dimension_numbers<[1], [0], [0], [1], [0, 0, 1, 1], [], []>} : vector<16x32xbf16>, vector<32x128xbf16>, vector<16x128xf32> -> vector<16x128xf32>
    %c0_42 = arith.constant 0 : index
    %c0_43 = arith.constant 0 : index
    %176 = vector.load %arg6[%c0_42, %c0_43] : memref<1x128xf32, #tpu.memory_space<vmem>>, vector<1x128xf32>
    %177 = vector.broadcast %176 : vector<1x128xf32> to vector<16x128xf32>
    %178 = arith.addf %175, %177 : vector<16x128xf32>
    %c0_44 = arith.constant 0 : index
    %c0_45 = arith.constant 0 : index
    %179 = vector.load %arg5[%c0_44, %c0_45] : memref<32x128xbf16, #tpu.memory_space<vmem>>, vector<32x128xbf16>
    %cst_46 = arith.constant 0.000000e+00 : f32
    %180 = vector.broadcast %cst_46 : f32 to vector<2x32xf32>
    %cst_47 = arith.constant 0.000000e+00 : f32
    %181 = vector.broadcast %cst_47 : f32 to vector<2x32xf32>
    %182 = vector.extract_strided_slice %178 {offsets = [0, 0], sizes = [2, 128], strides = [1, 1]} : vector<16x128xf32> to vector<2x128xf32>
    %183 = arith.truncf %180 : vector<2x32xf32> to vector<2x32xbf16>
    %cst_48 = arith.constant dense<0.000000e+00> : vector<2x128xf32>
    %184 = tpu.matmul %183, %179, %cst_48 {dimension_numbers = #tpu.dot_dimension_numbers<[1], [0], [0], [1], [0, 0, 1, 1], [], []>} : vector<2x32xbf16>, vector<32x128xbf16>, vector<2x128xf32> -> vector<2x128xf32>
    %185 = arith.addf %182, %184 : vector<2x128xf32>
    %186 = arith.negf %185 : vector<2x128xf32>
    %187 = math.exp %186 : vector<2x128xf32>
    %cst_49 = arith.constant 1.000000e+00 : f32
    %188 = vector.broadcast %cst_49 : f32 to vector<2x128xf32>
    %189 = arith.addf %188, %187 : vector<2x128xf32>
    %190 = arith.divf %188, %189 : vector<2x128xf32>
    %191 = math.tanh %185 : vector<2x128xf32>
    %192 = vector.extract_strided_slice %190 {offsets = [0, 0], sizes = [2, 32], strides = [1, 1]} : vector<2x128xf32> to vector<2x32xf32>
    %193 = vector.extract_strided_slice %190 {offsets = [0, 32], sizes = [2, 32], strides = [1, 1]} : vector<2x128xf32> to vector<2x32xf32>
    %194 = vector.extract_strided_slice %190 {offsets = [0, 64], sizes = [2, 32], strides = [1, 1]} : vector<2x128xf32> to vector<2x32xf32>
    %195 = vector.extract_strided_slice %191 {offsets = [0, 96], sizes = [2, 32], strides = [1, 1]} : vector<2x128xf32> to vector<2x32xf32>
    %196 = arith.mulf %193, %181 : vector<2x32xf32>
    %197 = arith.mulf %192, %195 : vector<2x32xf32>
    %198 = arith.addf %196, %197 : vector<2x32xf32>
    %199 = math.tanh %198 : vector<2x32xf32>
    %200 = arith.mulf %194, %199 : vector<2x32xf32>
    %201 = vector.extract_strided_slice %178 {offsets = [2, 0], sizes = [2, 128], strides = [1, 1]} : vector<16x128xf32> to vector<2x128xf32>
    %202 = arith.truncf %200 : vector<2x32xf32> to vector<2x32xbf16>
    %cst_50 = arith.constant dense<0.000000e+00> : vector<2x128xf32>
    %203 = tpu.matmul %202, %179, %cst_50 {dimension_numbers = #tpu.dot_dimension_numbers<[1], [0], [0], [1], [0, 0, 1, 1], [], []>} : vector<2x32xbf16>, vector<32x128xbf16>, vector<2x128xf32> -> vector<2x128xf32>
    %204 = arith.addf %201, %203 : vector<2x128xf32>
    %205 = arith.negf %204 : vector<2x128xf32>
    %206 = math.exp %205 : vector<2x128xf32>
    %cst_51 = arith.constant 1.000000e+00 : f32
    %207 = vector.broadcast %cst_51 : f32 to vector<2x128xf32>
    %208 = arith.addf %207, %206 : vector<2x128xf32>
    %209 = arith.divf %207, %208 : vector<2x128xf32>
    %210 = math.tanh %204 : vector<2x128xf32>
    %211 = vector.extract_strided_slice %209 {offsets = [0, 0], sizes = [2, 32], strides = [1, 1]} : vector<2x128xf32> to vector<2x32xf32>
    %212 = vector.extract_strided_slice %209 {offsets = [0, 32], sizes = [2, 32], strides = [1, 1]} : vector<2x128xf32> to vector<2x32xf32>
    %213 = vector.extract_strided_slice %209 {offsets = [0, 64], sizes = [2, 32], strides = [1, 1]} : vector<2x128xf32> to vector<2x32xf32>
    %214 = vector.extract_strided_slice %210 {offsets = [0, 96], sizes = [2, 32], strides = [1, 1]} : vector<2x128xf32> to vector<2x32xf32>
    %215 = arith.mulf %212, %198 : vector<2x32xf32>
    %216 = arith.mulf %211, %214 : vector<2x32xf32>
    %217 = arith.addf %215, %216 : vector<2x32xf32>
    %218 = math.tanh %217 : vector<2x32xf32>
    %219 = arith.mulf %213, %218 : vector<2x32xf32>
    %220 = vector.extract_strided_slice %178 {offsets = [4, 0], sizes = [2, 128], strides = [1, 1]} : vector<16x128xf32> to vector<2x128xf32>
    %221 = arith.truncf %219 : vector<2x32xf32> to vector<2x32xbf16>
    %cst_52 = arith.constant dense<0.000000e+00> : vector<2x128xf32>
    %222 = tpu.matmul %221, %179, %cst_52 {dimension_numbers = #tpu.dot_dimension_numbers<[1], [0], [0], [1], [0, 0, 1, 1], [], []>} : vector<2x32xbf16>, vector<32x128xbf16>, vector<2x128xf32> -> vector<2x128xf32>
    %223 = arith.addf %220, %222 : vector<2x128xf32>
    %224 = arith.negf %223 : vector<2x128xf32>
    %225 = math.exp %224 : vector<2x128xf32>
    %cst_53 = arith.constant 1.000000e+00 : f32
    %226 = vector.broadcast %cst_53 : f32 to vector<2x128xf32>
    %227 = arith.addf %226, %225 : vector<2x128xf32>
    %228 = arith.divf %226, %227 : vector<2x128xf32>
    %229 = math.tanh %223 : vector<2x128xf32>
    %230 = vector.extract_strided_slice %228 {offsets = [0, 0], sizes = [2, 32], strides = [1, 1]} : vector<2x128xf32> to vector<2x32xf32>
    %231 = vector.extract_strided_slice %228 {offsets = [0, 32], sizes = [2, 32], strides = [1, 1]} : vector<2x128xf32> to vector<2x32xf32>
    %232 = vector.extract_strided_slice %228 {offsets = [0, 64], sizes = [2, 32], strides = [1, 1]} : vector<2x128xf32> to vector<2x32xf32>
    %233 = vector.extract_strided_slice %229 {offsets = [0, 96], sizes = [2, 32], strides = [1, 1]} : vector<2x128xf32> to vector<2x32xf32>
    %234 = arith.mulf %231, %217 : vector<2x32xf32>
    %235 = arith.mulf %230, %233 : vector<2x32xf32>
    %236 = arith.addf %234, %235 : vector<2x32xf32>
    %237 = math.tanh %236 : vector<2x32xf32>
    %238 = arith.mulf %232, %237 : vector<2x32xf32>
    %239 = vector.extract_strided_slice %178 {offsets = [6, 0], sizes = [2, 128], strides = [1, 1]} : vector<16x128xf32> to vector<2x128xf32>
    %240 = arith.truncf %238 : vector<2x32xf32> to vector<2x32xbf16>
    %cst_54 = arith.constant dense<0.000000e+00> : vector<2x128xf32>
    %241 = tpu.matmul %240, %179, %cst_54 {dimension_numbers = #tpu.dot_dimension_numbers<[1], [0], [0], [1], [0, 0, 1, 1], [], []>} : vector<2x32xbf16>, vector<32x128xbf16>, vector<2x128xf32> -> vector<2x128xf32>
    %242 = arith.addf %239, %241 : vector<2x128xf32>
    %243 = arith.negf %242 : vector<2x128xf32>
    %244 = math.exp %243 : vector<2x128xf32>
    %cst_55 = arith.constant 1.000000e+00 : f32
    %245 = vector.broadcast %cst_55 : f32 to vector<2x128xf32>
    %246 = arith.addf %245, %244 : vector<2x128xf32>
    %247 = arith.divf %245, %246 : vector<2x128xf32>
    %248 = math.tanh %242 : vector<2x128xf32>
    %249 = vector.extract_strided_slice %247 {offsets = [0, 0], sizes = [2, 32], strides = [1, 1]} : vector<2x128xf32> to vector<2x32xf32>
    %250 = vector.extract_strided_slice %247 {offsets = [0, 32], sizes = [2, 32], strides = [1, 1]} : vector<2x128xf32> to vector<2x32xf32>
    %251 = vector.extract_strided_slice %247 {offsets = [0, 64], sizes = [2, 32], strides = [1, 1]} : vector<2x128xf32> to vector<2x32xf32>
    %252 = vector.extract_strided_slice %248 {offsets = [0, 96], sizes = [2, 32], strides = [1, 1]} : vector<2x128xf32> to vector<2x32xf32>
    %253 = arith.mulf %250, %236 : vector<2x32xf32>
    %254 = arith.mulf %249, %252 : vector<2x32xf32>
    %255 = arith.addf %253, %254 : vector<2x32xf32>
    %256 = math.tanh %255 : vector<2x32xf32>
    %257 = arith.mulf %251, %256 : vector<2x32xf32>
    %258 = vector.extract_strided_slice %178 {offsets = [8, 0], sizes = [2, 128], strides = [1, 1]} : vector<16x128xf32> to vector<2x128xf32>
    %259 = arith.truncf %257 : vector<2x32xf32> to vector<2x32xbf16>
    %cst_56 = arith.constant dense<0.000000e+00> : vector<2x128xf32>
    %260 = tpu.matmul %259, %179, %cst_56 {dimension_numbers = #tpu.dot_dimension_numbers<[1], [0], [0], [1], [0, 0, 1, 1], [], []>} : vector<2x32xbf16>, vector<32x128xbf16>, vector<2x128xf32> -> vector<2x128xf32>
    %261 = arith.addf %258, %260 : vector<2x128xf32>
    %262 = arith.negf %261 : vector<2x128xf32>
    %263 = math.exp %262 : vector<2x128xf32>
    %cst_57 = arith.constant 1.000000e+00 : f32
    %264 = vector.broadcast %cst_57 : f32 to vector<2x128xf32>
    %265 = arith.addf %264, %263 : vector<2x128xf32>
    %266 = arith.divf %264, %265 : vector<2x128xf32>
    %267 = math.tanh %261 : vector<2x128xf32>
    %268 = vector.extract_strided_slice %266 {offsets = [0, 0], sizes = [2, 32], strides = [1, 1]} : vector<2x128xf32> to vector<2x32xf32>
    %269 = vector.extract_strided_slice %266 {offsets = [0, 32], sizes = [2, 32], strides = [1, 1]} : vector<2x128xf32> to vector<2x32xf32>
    %270 = vector.extract_strided_slice %266 {offsets = [0, 64], sizes = [2, 32], strides = [1, 1]} : vector<2x128xf32> to vector<2x32xf32>
    %271 = vector.extract_strided_slice %267 {offsets = [0, 96], sizes = [2, 32], strides = [1, 1]} : vector<2x128xf32> to vector<2x32xf32>
    %272 = arith.mulf %269, %255 : vector<2x32xf32>
    %273 = arith.mulf %268, %271 : vector<2x32xf32>
    %274 = arith.addf %272, %273 : vector<2x32xf32>
    %275 = math.tanh %274 : vector<2x32xf32>
    %276 = arith.mulf %270, %275 : vector<2x32xf32>
    %277 = vector.extract_strided_slice %178 {offsets = [10, 0], sizes = [2, 128], strides = [1, 1]} : vector<16x128xf32> to vector<2x128xf32>
    %278 = arith.truncf %276 : vector<2x32xf32> to vector<2x32xbf16>
    %cst_58 = arith.constant dense<0.000000e+00> : vector<2x128xf32>
    %279 = tpu.matmul %278, %179, %cst_58 {dimension_numbers = #tpu.dot_dimension_numbers<[1], [0], [0], [1], [0, 0, 1, 1], [], []>} : vector<2x32xbf16>, vector<32x128xbf16>, vector<2x128xf32> -> vector<2x128xf32>
    %280 = arith.addf %277, %279 : vector<2x128xf32>
    %281 = arith.negf %280 : vector<2x128xf32>
    %282 = math.exp %281 : vector<2x128xf32>
    %cst_59 = arith.constant 1.000000e+00 : f32
    %283 = vector.broadcast %cst_59 : f32 to vector<2x128xf32>
    %284 = arith.addf %283, %282 : vector<2x128xf32>
    %285 = arith.divf %283, %284 : vector<2x128xf32>
    %286 = math.tanh %280 : vector<2x128xf32>
    %287 = vector.extract_strided_slice %285 {offsets = [0, 0], sizes = [2, 32], strides = [1, 1]} : vector<2x128xf32> to vector<2x32xf32>
    %288 = vector.extract_strided_slice %285 {offsets = [0, 32], sizes = [2, 32], strides = [1, 1]} : vector<2x128xf32> to vector<2x32xf32>
    %289 = vector.extract_strided_slice %285 {offsets = [0, 64], sizes = [2, 32], strides = [1, 1]} : vector<2x128xf32> to vector<2x32xf32>
    %290 = vector.extract_strided_slice %286 {offsets = [0, 96], sizes = [2, 32], strides = [1, 1]} : vector<2x128xf32> to vector<2x32xf32>
    %291 = arith.mulf %288, %274 : vector<2x32xf32>
    %292 = arith.mulf %287, %290 : vector<2x32xf32>
    %293 = arith.addf %291, %292 : vector<2x32xf32>
    %294 = math.tanh %293 : vector<2x32xf32>
    %295 = arith.mulf %289, %294 : vector<2x32xf32>
    %296 = vector.extract_strided_slice %178 {offsets = [12, 0], sizes = [2, 128], strides = [1, 1]} : vector<16x128xf32> to vector<2x128xf32>
    %297 = arith.truncf %295 : vector<2x32xf32> to vector<2x32xbf16>
    %cst_60 = arith.constant dense<0.000000e+00> : vector<2x128xf32>
    %298 = tpu.matmul %297, %179, %cst_60 {dimension_numbers = #tpu.dot_dimension_numbers<[1], [0], [0], [1], [0, 0, 1, 1], [], []>} : vector<2x32xbf16>, vector<32x128xbf16>, vector<2x128xf32> -> vector<2x128xf32>
    %299 = arith.addf %296, %298 : vector<2x128xf32>
    %300 = arith.negf %299 : vector<2x128xf32>
    %301 = math.exp %300 : vector<2x128xf32>
    %cst_61 = arith.constant 1.000000e+00 : f32
    %302 = vector.broadcast %cst_61 : f32 to vector<2x128xf32>
    %303 = arith.addf %302, %301 : vector<2x128xf32>
    %304 = arith.divf %302, %303 : vector<2x128xf32>
    %305 = math.tanh %299 : vector<2x128xf32>
    %306 = vector.extract_strided_slice %304 {offsets = [0, 0], sizes = [2, 32], strides = [1, 1]} : vector<2x128xf32> to vector<2x32xf32>
    %307 = vector.extract_strided_slice %304 {offsets = [0, 32], sizes = [2, 32], strides = [1, 1]} : vector<2x128xf32> to vector<2x32xf32>
    %308 = vector.extract_strided_slice %304 {offsets = [0, 64], sizes = [2, 32], strides = [1, 1]} : vector<2x128xf32> to vector<2x32xf32>
    %309 = vector.extract_strided_slice %305 {offsets = [0, 96], sizes = [2, 32], strides = [1, 1]} : vector<2x128xf32> to vector<2x32xf32>
    %310 = arith.mulf %307, %293 : vector<2x32xf32>
    %311 = arith.mulf %306, %309 : vector<2x32xf32>
    %312 = arith.addf %310, %311 : vector<2x32xf32>
    %313 = math.tanh %312 : vector<2x32xf32>
    %314 = arith.mulf %308, %313 : vector<2x32xf32>
    %315 = vector.extract_strided_slice %178 {offsets = [14, 0], sizes = [2, 128], strides = [1, 1]} : vector<16x128xf32> to vector<2x128xf32>
    %316 = arith.truncf %314 : vector<2x32xf32> to vector<2x32xbf16>
    %cst_62 = arith.constant dense<0.000000e+00> : vector<2x128xf32>
    %317 = tpu.matmul %316, %179, %cst_62 {dimension_numbers = #tpu.dot_dimension_numbers<[1], [0], [0], [1], [0, 0, 1, 1], [], []>} : vector<2x32xbf16>, vector<32x128xbf16>, vector<2x128xf32> -> vector<2x128xf32>
    %318 = arith.addf %315, %317 : vector<2x128xf32>
    %319 = arith.negf %318 : vector<2x128xf32>
    %320 = math.exp %319 : vector<2x128xf32>
    %cst_63 = arith.constant 1.000000e+00 : f32
    %321 = vector.broadcast %cst_63 : f32 to vector<2x128xf32>
    %322 = arith.addf %321, %320 : vector<2x128xf32>
    %323 = arith.divf %321, %322 : vector<2x128xf32>
    %324 = math.tanh %318 : vector<2x128xf32>
    %325 = vector.extract_strided_slice %323 {offsets = [0, 0], sizes = [2, 32], strides = [1, 1]} : vector<2x128xf32> to vector<2x32xf32>
    %326 = vector.extract_strided_slice %323 {offsets = [0, 32], sizes = [2, 32], strides = [1, 1]} : vector<2x128xf32> to vector<2x32xf32>
    %327 = vector.extract_strided_slice %323 {offsets = [0, 64], sizes = [2, 32], strides = [1, 1]} : vector<2x128xf32> to vector<2x32xf32>
    %328 = vector.extract_strided_slice %324 {offsets = [0, 96], sizes = [2, 32], strides = [1, 1]} : vector<2x128xf32> to vector<2x32xf32>
    %329 = arith.mulf %326, %312 : vector<2x32xf32>
    %330 = arith.mulf %325, %328 : vector<2x32xf32>
    %331 = arith.addf %329, %330 : vector<2x32xf32>
    %332 = math.tanh %331 : vector<2x32xf32>
    %333 = arith.mulf %327, %332 : vector<2x32xf32>
    %c1 = arith.constant 1 : index
    %c0_64 = arith.constant 0 : index
    %c0_65 = arith.constant 0 : index
    %334 = vector.load %arg10[%c1, %c0_64, %c0_65] : memref<2x2x32xf32, #tpu.memory_space<vmem>>, vector<1x2x32xf32>
    %335 = vector.shape_cast %334 : vector<1x2x32xf32> to vector<2x32xf32>
    %336 = vector.shape_cast %333 : vector<2x32xf32> to vector<1x2x32xf32>
    tpu.vector_store %arg10[%c1, %c0_64, %c0_65], %336 {strides = array<i32>} : memref<2x2x32xf32, #tpu.memory_space<vmem>>, vector<1x2x32xf32>,
    %c0_66 = arith.constant 0 : index
    %c0_67 = arith.constant 0 : index
    %337 = vector.load %arg7[%c0_66, %c0_67] : memref<32x128xf32, #tpu.memory_space<vmem>>, vector<32x128xf32>
    %cst_68 = arith.constant dense<0.000000e+00> : vector<2x128xf32>
    %338 = tpu.matmul %333, %337, %cst_68 {dimension_numbers = #tpu.dot_dimension_numbers<[1], [0], [0], [1], [0, 0, 1, 1], [], []>} : vector<2x32xf32>, vector<32x128xf32>, vector<2x128xf32> -> vector<2x128xf32>
    %c0_69 = arith.constant 0 : index
    %c0_70 = arith.constant 0 : index
    %339 = vector.load %arg8[%c0_69, %c0_70] : memref<1x128xf32, #tpu.memory_space<vmem>>, vector<1x128xf32>
    %340 = vector.broadcast %339 : vector<1x128xf32> to vector<2x128xf32>
    %341 = arith.addf %338, %340 : vector<2x128xf32>
    %cst_71 = arith.constant dense<0xFF800000> : vector<2xf32>
    %342 = vector.multi_reduction <maximumf>, %341, %cst_71 [1] : vector<2x128xf32> to vector<2xf32>
    %343 = vector.shape_cast %342 : vector<2xf32> to vector<2x1xf32>
    %344 = vector.broadcast %343 : vector<2x1xf32> to vector<2x128xf32>
    %345 = arith.subf %341, %344 : vector<2x128xf32>
    %346 = math.exp %345 : vector<2x128xf32>
    %cst_72 = arith.constant dense<0.000000e+00> : vector<2xf32>
    %347 = vector.multi_reduction <add>, %346, %cst_72 [1] : vector<2x128xf32> to vector<2xf32>
    %348 = vector.shape_cast %347 : vector<2xf32> to vector<2x1xf32>
    %349 = math.log %348 : vector<2x1xf32>
    %350 = arith.addf %343, %349 : vector<2x1xf32>
    %351 = vector.broadcast %350 : vector<2x1xf32> to vector<2x128xf32>
    %352 = arith.subf %341, %351 : vector<2x128xf32>
    %c0_73 = arith.constant 0 : index
    %c0_74 = arith.constant 0 : index
    %353 = vector.load %arg9[%c0_73, %c0_74] : memref<2x128xf32, #tpu.memory_space<vmem>>, vector<2x128xf32>
    tpu.vector_store %arg9[%c0_73, %c0_74], %352 {strides = array<i32>} : memref<2x128xf32, #tpu.memory_space<vmem>>, vector<2x128xf32>,
    return
  }
}

</mosaic_0001>

<llo_original>
// kernel: tpu_custom_call.1
$region0: #{tpu_custom_call.1}
  #allocation0 [shape = 'u32[]', space=smem, size = 0x4, offset = 0x4, fixed_abs, tag = 'smem constant byte address 0x4 - core index']
  #allocation1 [shape = 'u32[144,128]{1,0:T(1,128)}', space=vmem, size = 0x12000, scoped, tag = 'internal scratch']
  #allocation2 [shape = 'f32[16,32]{1,0:T(8,128)}', space=vmem, size = 0x2000, scoped, tag = 'scratch operand']
  %s0 = inlined_call_operand.hbm [shape: bf16[16,16], index: 0, kind: input, shape index: {}]
  %s1 = inlined_call_operand.hbm [shape: bf16[16,128], index: 1, kind: input, shape index: {}]
  %s2 = inlined_call_operand.hbm [shape: bf16[32,128], index: 2, kind: input, shape index: {}]
  %s3 = inlined_call_operand.vmem [shape: f32[1,128], index: 3, kind: input, shape index: {}]
  %s4 = inlined_call_operand.hbm [shape: bf16[32,128], index: 4, kind: input, shape index: {}]
  %s5 = inlined_call_operand.hbm [shape: bf16[32,128], index: 5, kind: input, shape index: {}]
  %s6 = inlined_call_operand.vmem [shape: f32[1,128], index: 6, kind: input, shape index: {}]
  %s7 = inlined_call_operand.hbm [shape: f32[32,128], index: 7, kind: input, shape index: {}]
  %s8 = inlined_call_operand.vmem [shape: f32[1,128], index: 8, kind: input, shape index: {}]
  %s9 = inlined_call_operand.hbm [shape: f32[2,128], index: 9, kind: output, shape index: {0}]
  %s10 = inlined_call_operand.hbm [shape: f32[2,2,32], index: 10, kind: output, shape index: {1}]
  %11 = xla_tuple %s9, %s10
  %s12 = sld [smem:[#allocation0]]
  $region78: #{tpu_custom_call.1} parent=0
    _
  %s14 = ssub.s32 1, %s12
  %s15 = scalar_select 0, %s14, %s12
  $region1: #{tpu_custom_call.1} parent=0
    #allocation3 [shape = 'u8[4096]{0}', space=vmem, size = 0x1000, scoped, tag = 'input window, operand 0, single buffered']
    #allocation4 [shape = 's32[1]{0}', space=sflag, size = 0x4, scoped, tag = 'scoped memory for tpu_custom_call.1']
    #allocation5 [shape = 's32[1]{0}', space=sflag, size = 0x4, scoped, tag = 'scoped memory for tpu_custom_call.1']
    #allocation6 [shape = 'u8[4096]{0}', space=vmem, size = 0x1000, scoped, tag = 'input window, operand 1, single buffered']
    #allocation7 [shape = 's32[1]{0}', space=sflag, size = 0x4, scoped, tag = 'scoped memory for tpu_custom_call.1']
    #allocation8 [shape = 'u8[8192]{0}', space=vmem, size = 0x2000, scoped, tag = 'input window, operand 2, single buffered']
    #allocation9 [shape = 'u8[8192]{0}', space=vmem, size = 0x2000, scoped, tag = 'input window, operand 4, single buffered']
    #allocation10 [shape = 's32[1]{0}', space=sflag, size = 0x4, scoped, tag = 'scoped memory for tpu_custom_call.1']
    #allocation11 [shape = 'u8[8192]{0}', space=vmem, size = 0x2000, scoped, tag = 'input window, operand 5, single buffered']
    #allocation12 [shape = 'u8[16384]{0}', space=vmem, size = 0x4000, scoped, tag = 'input window, operand 7, single buffered']
    #allocation13 [shape = 's32[1]{0}', space=sflag, size = 0x4, scoped, tag = 'scoped memory for tpu_custom_call.1']
    #allocation14 [shape = 'u8[1024]{0}', space=vmem, size = 0x400, scoped, tag = 'output window, operand 0, single buffered']
    #allocation15 [shape = 'u8[2048]{0}', space=vmem, size = 0x800, scoped, tag = 'output window, operand 1, single buffered']
    #allocation16 [shape = 's32[1]{0}', space=sflag, size = 0x4, scoped, tag = 'scoped memory for tpu_custom_call.1']
    %16 = vsyncpa [#allocation4], 0
    %17 = vsyncpa [#allocation7], 0
    %18 = vsyncpa [#allocation10], 0
    %19 = vsyncpa [#allocation13], 0
    %20 = vsyncpa [#allocation5], 0
    %21 = vsyncpa [#allocation16], 0
    // Predicated region
    $region2: #{tpu_custom_call.1} parent=1 // pred_check
      _
    $region3: #{tpu_custom_call.1} parent=1 // pred_check_branch
      %23 = sbr.rel (0) target = $region5
    $region4: #{tpu_custom_call.1} parent=1 // pred_region
      %s25 = ssub.s32 128, 128
      %26 = vsyncadd [#allocation4], %s25
      %s27 = sshll.u32 [#allocation3], 4
      %s28 = int_to_ptr.vmem [resolvable:$true] %s27
      %33 = dma.hbm_to_vmem [thread:$0]  %s0, 128, %s28, [#allocation4], 64, 64, 4
    $region5: #{tpu_custom_call.1} parent=1 // pred_fallthru
      _
    // Predicated region
    $region6: #{tpu_custom_call.1} parent=1 // pred_check
      _
    $region7: #{tpu_custom_call.1} parent=1 // pred_check_branch
      %35 = sbr.rel (0) target = $region9
    $region8: #{tpu_custom_call.1} parent=1 // pred_region
      %s37 = ssub.s32 128, 128
      %38 = vsyncadd [#allocation7], %s37
      %s39 = sshll.u32 [#allocation6], 4
      %s40 = int_to_ptr.vmem [resolvable:$true] %s39
      %45 = dma.hbm_to_vmem [thread:$0]  %s1, 128, %s40, [#allocation7], 64, 64, 4
    $region9: #{tpu_custom_call.1} parent=1 // pred_fallthru
      _
    // Predicated region
    $region10: #{tpu_custom_call.1} parent=1 // pred_check
      _
    $region11: #{tpu_custom_call.1} parent=1 // pred_check_branch
      %47 = sbr.rel (0) target = $region13
    $region12: #{tpu_custom_call.1} parent=1 // pred_region
      %s49 = ssub.s32 256, 256
      %50 = vsyncadd [#allocation7], %s49
      %s51 = sshll.u32 [#allocation8], 4
      %s52 = int_to_ptr.vmem [resolvable:$true] %s51
      %57 = dma.hbm_to_vmem [thread:$0]  %s2, 256, %s52, [#allocation7], 64, 64, 4
    $region13: #{tpu_custom_call.1} parent=1 // pred_fallthru
      _
    // Predicated region
    $region14: #{tpu_custom_call.1} parent=1 // pred_check
      _
    $region15: #{tpu_custom_call.1} parent=1 // pred_check_branch
      %59 = sbr.rel (0) target = $region17
    $region16: #{tpu_custom_call.1} parent=1 // pred_region
      _
    $region17: #{tpu_custom_call.1} parent=1 // pred_fallthru
      _
    // Predicated region
    $region18: #{tpu_custom_call.1} parent=1 // pred_check
      _
    $region19: #{tpu_custom_call.1} parent=1 // pred_check_branch
      %61 = sbr.rel (0) target = $region21
    $region20: #{tpu_custom_call.1} parent=1 // pred_region
      %s63 = ssub.s32 256, 256
      %64 = vsyncadd [#allocation10], %s63
      %s65 = sshll.u32 [#allocation9], 4
      %s66 = int_to_ptr.vmem [resolvable:$true] %s65
      %71 = dma.hbm_to_vmem [thread:$0]  %s4, 256, %s66, [#allocation10], 64, 64, 4
    $region21: #{tpu_custom_call.1} parent=1 // pred_fallthru
      _
    // Predicated region
    $region22: #{tpu_custom_call.1} parent=1 // pred_check
      _
    $region23: #{tpu_custom_call.1} parent=1 // pred_check_branch
      %73 = sbr.rel (0) target = $region25
    $region24: #{tpu_custom_call.1} parent=1 // pred_region
      %s75 = ssub.s32 256, 256
      %76 = vsyncadd [#allocation10], %s75
      %s77 = sshll.u32 [#allocation11], 4
      %s78 = int_to_ptr.vmem [resolvable:$true] %s77
      %83 = dma.hbm_to_vmem [thread:$0]  %s5, 256, %s78, [#allocation10], 64, 64, 4
    $region25: #{tpu_custom_call.1} parent=1 // pred_fallthru
      _
    // Predicated region
    $region26: #{tpu_custom_call.1} parent=1 // pred_check
      _
    $region27: #{tpu_custom_call.1} parent=1 // pred_check_branch
      %85 = sbr.rel (0) target = $region29
    $region28: #{tpu_custom_call.1} parent=1 // pred_region
      _
    $region29: #{tpu_custom_call.1} parent=1 // pred_fallthru
      _
    // Predicated region
    $region30: #{tpu_custom_call.1} parent=1 // pred_check
      _
    $region31: #{tpu_custom_call.1} parent=1 // pred_check_branch
      %87 = sbr.rel (0) target = $region33
    $region32: #{tpu_custom_call.1} parent=1 // pred_region
      %s89 = ssub.s32 512, 512
      %90 = vsyncadd [#allocation13], %s89
      %s91 = sshll.u32 [#allocation12], 4
      %s92 = int_to_ptr.vmem [resolvable:$true] %s91
      %97 = dma.hbm_to_vmem [thread:$0]  %s7, 512, %s92, [#allocation13], 128, 128, 8
    $region33: #{tpu_custom_call.1} parent=1 // pred_fallthru
      _
    // Predicated region
    $region34: #{tpu_custom_call.1} parent=1 // pred_check
      _
    $region35: #{tpu_custom_call.1} parent=1 // pred_check_branch
      %99 = sbr.rel (0) target = $region37
    $region36: #{tpu_custom_call.1} parent=1 // pred_region
      _
    $region37: #{tpu_custom_call.1} parent=1 // pred_fallthru
      _
    // Predicated region
    $region38: #{tpu_custom_call.1} parent=1 // pred_check
      _
    $region39: #{tpu_custom_call.1} parent=1 // pred_check_branch
      %101 = sbr.rel (0) target = $region41
    $region40: #{tpu_custom_call.1} parent=1 // pred_region
      %102 = dma.done [#allocation4], 128
    $region41: #{tpu_custom_call.1} parent=1 // pred_fallthru
      _
    // Predicated region
    $region42: #{tpu_custom_call.1} parent=1 // pred_check
      _
    $region43: #{tpu_custom_call.1} parent=1 // pred_check_branch
      %104 = sbr.rel (0) target = $region45
    $region44: #{tpu_custom_call.1} parent=1 // pred_region
      %105 = dma.done [#allocation7], 128
    $region45: #{tpu_custom_call.1} parent=1 // pred_fallthru
      _
    // Predicated region
    $region46: #{tpu_custom_call.1} parent=1 // pred_check
      _
    $region47: #{tpu_custom_call.1} parent=1 // pred_check_branch
      %107 = sbr.rel (0) target = $region49
    $region48: #{tpu_custom_call.1} parent=1 // pred_region
      %108 = dma.done [#allocation7], 256
    $region49: #{tpu_custom_call.1} parent=1 // pred_fallthru
      _
    // Predicated region
    $region50: #{tpu_custom_call.1} parent=1 // pred_check
      _
    $region51: #{tpu_custom_call.1} parent=1 // pred_check_branch
      %110 = sbr.rel (0) target = $region53
    $region52: #{tpu_custom_call.1} parent=1 // pred_region
      %111 = dma.done [#allocation10], 256
    $region53: #{tpu_custom_call.1} parent=1 // pred_fallthru
      _
    // Predicated region
    $region54: #{tpu_custom_call.1} parent=1 // pred_check
      _
    $region55: #{tpu_custom_call.1} parent=1 // pred_check_branch
      %113 = sbr.rel (0) target = $region57
    $region56: #{tpu_custom_call.1} parent=1 // pred_region
      %114 = dma.done [#allocation10], 256
    $region57: #{tpu_custom_call.1} parent=1 // pred_fallthru
      _
    // Predicated region
    $region58: #{tpu_custom_call.1} parent=1 // pred_check
      _
    $region59: #{tpu_custom_call.1} parent=1 // pred_check_branch
      %116 = sbr.rel (0) target = $region61
    $region60: #{tpu_custom_call.1} parent=1 // pred_region
      %117 = dma.done [#allocation13], 512
    $region61: #{tpu_custom_call.1} parent=1 // pred_fallthru
      _
    %v119 = vld [vmem:[#allocation3] sm:$0xf]
    %v120 = vld [vmem:[#allocation3 + $0x4] sm:$0xf]
    %v121 = vld [vmem:[#allocation6] sm:$0xf]
    %v122 = vld [vmem:[#allocation6 + $0x4] sm:$0xf]
    %v123 = vld [vmem:[%s3] sm:$0x1]
    %v125 = vlaneseq
    %v126 = vshrl.u32 %v125, 7
    %v127 = vsub.s32 0, %v126
    %v128 = vrot.slane %v123, %v127
    %v132 = vunpack.c.l.b16 %v119
    %v133 = vunpack.c.l.b16 %v120
    %v134 = vpack.c.b16 %v133, %v132
    %v137 = vunpack.c.l.b16 %v121
    %v138 = vunpack.c.l.b16 %v122
    %v139 = vpack.c.b16 %v138, %v137
    %vm141 = vcmask 130048
    %v143 = vsel %vm141, %v134, 0
    %145 = vmatprep.subr.bf16.mxu0 0
    %146 = vmatpush1.bf16.msra.mxu0 0
    %147 = vmatprep.subr.bf16.mxu0 0
    %148 = vmatpush1.bf16.msra.mxu0 0
    %149 = vmatprep.subr.bf16.mxu0 0
    %150 = vmatpush1.bf16.msra.mxu0 0
    %151 = vmatprep.subr.bf16.mxu0 0
    %152 = vmatpush1.bf16.msra.mxu0 0
    %153 = vmatprep.subr.bf16.mxu0 0
    %154 = vmatpush1.bf16.msra.mxu0 0
    %155 = vmatprep.subr.bf16.mxu0 0
    %156 = vmatpush1.bf16.msra.mxu0 0
    %157 = vmatprep.subr.bf16.mxu0 0
    %158 = vmatpush1.bf16.msra.mxu0 0
    %159 = vmatprep.subr.bf16.mxu0 0
    %160 = vmatpush1.bf16.msra.mxu0 %v139
    %161 = vmatprep.subr.bf16.mxu0 0
    %162 = vmatpush2.bf16.msra.mxu0 0
    %163 = vmatprep.subr.bf16.mxu0 0
    %164 = vmatpush2.bf16.msra.mxu0 0
    %165 = vmatprep.subr.bf16.mxu0 0
    %166 = vmatpush2.bf16.msra.mxu0 0
    %167 = vmatprep.subr.bf16.mxu0 0
    %168 = vmatpush2.bf16.msra.mxu0 0
    %169 = vmatprep.subr.bf16.mxu0 0
    %170 = vmatpush2.bf16.msra.mxu0 0
    %171 = vmatprep.subr.bf16.mxu0 0
    %172 = vmatpush2.bf16.msra.mxu0 0
    %173 = vmatprep.subr.bf16.mxu0 0
    %174 = vmatpush2.bf16.msra.mxu0 0
    %175 = vmatprep.subr.bf16.mxu0 0
    %176 = vmatpush2.bf16.msra.mxu0 0
    %177 = vmatprep.mubr.bf16.mxu0 0
    %178 = vmatmul.mubr.bf16.gmra.mxu0 %v143
    %v179 = vpop.f32.mrf.mxu0
    %v180 = vadd.f32 %v128, %v179
    %v181 = vpop.f32.mrf.mxu0
    %v182 = vpop.f32.mrf.mxu0
    %v183 = vadd.f32 %v128, %v182
    %v184 = vpop.f32.mrf.mxu0
    %185 = vdwg.mxu0
    %v186 = vld [vmem:[#allocation8] sm:$0xf]
    %v187 = vld [vmem:[#allocation8 + $0x4] sm:$0xf]
    %v188 = vld [vmem:[#allocation8 + $0x8] sm:$0xf]
    %v189 = vld [vmem:[#allocation8 + $0xc] sm:$0xf]
    %v194 = vunpack.c.l.b16 %v186
    %v195 = vunpack.c.l.b16 %v187
    %v196 = vunpack.c.l.b16 %v188
    %v197 = vunpack.c.l.b16 %v189
    %v198 = vpack.c.b16 %v195, %v194
    %v199 = vpack.c.b16 %v197, %v196
    %vm202 = vcmask 261120
    %v204 = vsel %vm202, 0, 0
    %206 = vmatprep.subr.bf16.mxu0 0
    %207 = vmatpush1.bf16.msra.mxu0 0
    %208 = vmatprep.subr.bf16.mxu0 0
    %209 = vmatpush1.bf16.msra.mxu0 0
    %210 = vmatprep.subr.bf16.mxu0 0
    %211 = vmatpush1.bf16.msra.mxu0 0
    %212 = vmatprep.subr.bf16.mxu0 0
    %213 = vmatpush1.bf16.msra.mxu0 0
    %214 = vmatprep.subr.bf16.mxu0 0
    %215 = vmatpush1.bf16.msra.mxu0 0
    %216 = vmatprep.subr.bf16.mxu0 0
    %217 = vmatpush1.bf16.msra.mxu0 0
    %218 = vmatprep.subr.bf16.mxu0 0
    %219 = vmatpush1.bf16.msra.mxu0 %v199
    %220 = vmatprep.subr.bf16.mxu0 0
    %221 = vmatpush1.bf16.msra.mxu0 %v198
    %222 = vmatprep.subr.bf16.mxu0 0
    %223 = vmatpush2.bf16.msra.mxu0 0
    %224 = vmatprep.subr.bf16.mxu0 0
    %225 = vmatpush2.bf16.msra.mxu0 0
    %226 = vmatprep.subr.bf16.mxu0 0
    %227 = vmatpush2.bf16.msra.mxu0 0
    %228 = vmatprep.subr.bf16.mxu0 0
    %229 = vmatpush2.bf16.msra.mxu0 0
    %230 = vmatprep.subr.bf16.mxu0 0
    %231 = vmatpush2.bf16.msra.mxu0 0
    %232 = vmatprep.subr.bf16.mxu0 0
    %233 = vmatpush2.bf16.msra.mxu0 0
    %234 = vmatprep.subr.bf16.mxu0 0
    %235 = vmatpush2.bf16.msra.mxu0 0
    %236 = vmatprep.subr.bf16.mxu0 0
    %237 = vmatpush2.bf16.msra.mxu0 0
    %238 = vmatprep.mubr.bf16.mxu0 0
    %239 = vmatmul.mubr.bf16.gmra.mxu0 %v204
    %v240 = vpop.f32.mrf.mxu0
    %v241 = vadd.f32 0.0, %v240
    %v242 = vpop.f32.mrf.mxu0
    %v243 = vpop.f32.mrf.mxu0
    %v244 = vpop.f32.mrf.mxu0
    %245 = vdwg.mxu0
    %v246 = vadd.f32 %v180, %v241
    %v247 = vxor.u32 %v246, 2147483648
    %v248 = vmul.f32 %v247, 1.442695
    %v249 = vpow.pop %v248
    %v250 = vadd.f32 %v249, 1.0
    %v251 = vrcp.pop %v250
    %v252 = vmul.f32 1.0, %v251
    %v253 = vtanh.pop %v246
    %v254 = vmul.f32 %v252, 0.0
    %256 = vrot.lane.b32.xlu0 %v253, 32
    %v257 = vpop.permute.xlu0 %256
    %v259 = vmul.f32 %v252, %v257
    %261 = vrot.lane.b32.xlu0 %v259, 32
    %v262 = vpop.permute.xlu0 %261
    %v264 = vadd.f32 %v254, %v262
    %v265 = vtanh.pop %v264
    %267 = vrot.lane.b32.xlu0 %v265, 32
    %v268 = vpop.permute.xlu0 %267
    %v270 = vmul.f32 %v252, %v268
    %272 = vrot.lane.b32.xlu0 %v270, 64
    %v273 = vpop.permute.xlu0 %272
    %vm275 = vcmask 254976
    %276 = vst.msk [vmem:[#allocation2] sm:$0x3] %vm275, %v273
    %v277 = vpack.c.bf16 %v270, %v270
    %279 = vrot.lane.b32.xlu0 %v277, 64
    %v280 = vpop.permute.xlu0 %279
    %v282 = vsel %vm202, %v280, 0
    %284 = vmatprep.subr.bf16.mxu0 0
    %285 = vmatpush1.bf16.msra.mxu0 0
    %286 = vmatprep.subr.bf16.mxu0 0
    %287 = vmatpush1.bf16.msra.mxu0 0
    %288 = vmatprep.subr.bf16.mxu0 0
    %289 = vmatpush1.bf16.msra.mxu0 0
    %290 = vmatprep.subr.bf16.mxu0 0
    %291 = vmatpush1.bf16.msra.mxu0 0
    %292 = vmatprep.subr.bf16.mxu0 0
    %293 = vmatpush1.bf16.msra.mxu0 0
    %294 = vmatprep.subr.bf16.mxu0 0
    %295 = vmatpush1.bf16.msra.mxu0 0
    %296 = vmatprep.subr.bf16.mxu0 0
    %297 = vmatpush1.bf16.msra.mxu0 %v199
    %298 = vmatprep.subr.bf16.mxu0 0
    %299 = vmatpush1.bf16.msra.mxu0 %v198
    %300 = vmatprep.subr.bf16.mxu0 0
    %301 = vmatpush2.bf16.msra.mxu0 0
    %302 = vmatprep.subr.bf16.mxu0 0
    %303 = vmatpush2.bf16.msra.mxu0 0
    %304 = vmatprep.subr.bf16.mxu0 0
    %305 = vmatpush2.bf16.msra.mxu0 0
    %306 = vmatprep.subr.bf16.mxu0 0
    %307 = vmatpush2.bf16.msra.mxu0 0
    %308 = vmatprep.subr.bf16.mxu0 0
    %309 = vmatpush2.bf16.msra.mxu0 0
    %310 = vmatprep.subr.bf16.mxu0 0
    %311 = vmatpush2.bf16.msra.mxu0 0
    %312 = vmatprep.subr.bf16.mxu0 0
    %313 = vmatpush2.bf16.msra.mxu0 0
    %314 = vmatprep.subr.bf16.mxu0 0
    %315 = vmatpush2.bf16.msra.mxu0 0
    %316 = vmatprep.mubr.bf16.mxu0 0
    %317 = vmatmul.mubr.bf16.gmra.mxu0 %v282
    %v318 = vpop.f32.mrf.mxu0
    %v319 = vadd.f32 0.0, %v318
    %v320 = vpop.f32.mrf.mxu0
    %v321 = vpop.f32.mrf.mxu0
    %v322 = vpop.f32.mrf.mxu0
    %323 = vdwg.mxu0
    %v325 = vrot.slane %v319, 6
    %v327 = vadd.f32 %v180, %v325
    %v328 = vxor.u32 %v327, 2147483648
    %v329 = vmul.f32 %v328, 1.442695
    %v330 = vpow.pop %v329
    %v331 = vadd.f32 %v330, 1.0
    %v332 = vrcp.pop %v331
    %v333 = vmul.f32 1.0, %v332
    %v334 = vtanh.pop %v327
    %v336 = vrot.slane %v264, 6
    %v338 = vmul.f32 %v333, %v336
    %340 = vrot.lane.b32.xlu0 %v334, 32
    %v341 = vpop.permute.xlu0 %340
    %v343 = vmul.f32 %v333, %v341
    %345 = vrot.lane.b32.xlu0 %v343, 32
    %v346 = vpop.permute.xlu0 %345
    %v348 = vadd.f32 %v338, %v346
    %v349 = vtanh.pop %v348
    %351 = vrot.lane.b32.xlu0 %v349, 32
    %v352 = vpop.permute.xlu0 %351
    %v354 = vmul.f32 %v333, %v352
    %356 = vrot.lane.b32.xlu0 %v354, 64
    %v357 = vpop.permute.xlu0 %356
    %vm359 = vcmask 257026
    %360 = vst.msk [vmem:[#allocation2] sm:$0xc] %vm359, %v357
    %v361 = vpack.c.bf16 %v354, %v354
    %v363 = vrot.slane %v361, 1
    %364 = vrot.lane.b32.xlu0 %v363, 64
    %v365 = vpop.permute.xlu0 %364
    %v367 = vsel %vm202, %v365, 0
    %369 = vmatprep.subr.bf16.mxu0 0
    %370 = vmatpush1.bf16.msra.mxu0 0
    %371 = vmatprep.subr.bf16.mxu0 0
    %372 = vmatpush1.bf16.msra.mxu0 0
    %373 = vmatprep.subr.bf16.mxu0 0
    %374 = vmatpush1.bf16.msra.mxu0 0
    %375 = vmatprep.subr.bf16.mxu0 0
    %376 = vmatpush1.bf16.msra.mxu0 0
    %377 = vmatprep.subr.bf16.mxu0 0
    %378 = vmatpush1.bf16.msra.mxu0 0
    %379 = vmatprep.subr.bf16.mxu0 0
    %380 = vmatpush1.bf16.msra.mxu0 0
    %381 = vmatprep.subr.bf16.mxu0 0
    %382 = vmatpush1.bf16.msra.mxu0 %v199
    %383 = vmatprep.subr.bf16.mxu0 0
    %384 = vmatpush1.bf16.msra.mxu0 %v198
    %385 = vmatprep.subr.bf16.mxu0 0
    %386 = vmatpush2.bf16.msra.mxu0 0
    %387 = vmatprep.subr.bf16.mxu0 0
    %388 = vmatpush2.bf16.msra.mxu0 0
    %389 = vmatprep.subr.bf16.mxu0 0
    %390 = vmatpush2.bf16.msra.mxu0 0
    %391 = vmatprep.subr.bf16.mxu0 0
    %392 = vmatpush2.bf16.msra.mxu0 0
    %393 = vmatprep.subr.bf16.mxu0 0
    %394 = vmatpush2.bf16.msra.mxu0 0
    %395 = vmatprep.subr.bf16.mxu0 0
    %396 = vmatpush2.bf16.msra.mxu0 0
    %397 = vmatprep.subr.bf16.mxu0 0
    %398 = vmatpush2.bf16.msra.mxu0 0
    %399 = vmatprep.subr.bf16.mxu0 0
    %400 = vmatpush2.bf16.msra.mxu0 0
    %401 = vmatprep.mubr.bf16.mxu0 0
    %402 = vmatmul.mubr.bf16.gmra.mxu0 %v367
    %v403 = vpop.f32.mrf.mxu0
    %v404 = vadd.f32 0.0, %v403
    %v405 = vpop.f32.mrf.mxu0
    %v406 = vpop.f32.mrf.mxu0
    %v407 = vpop.f32.mrf.mxu0
    %408 = vdwg.mxu0
    %v410 = vrot.slane %v404, 4
    %v412 = vadd.f32 %v180, %v410
    %v413 = vxor.u32 %v412, 2147483648
    %v414 = vmul.f32 %v413, 1.442695
    %v415 = vpow.pop %v414
    %v416 = vadd.f32 %v415, 1.0
    %v417 = vrcp.pop %v416
    %v418 = vmul.f32 1.0, %v417
    %v419 = vtanh.pop %v412
    %v421 = vrot.slane %v348, 6
    %v423 = vmul.f32 %v418, %v421
    %425 = vrot.lane.b32.xlu0 %v419, 32
    %v426 = vpop.permute.xlu0 %425
    %v428 = vmul.f32 %v418, %v426
    %430 = vrot.lane.b32.xlu0 %v428, 32
    %v431 = vpop.permute.xlu0 %430
    %v433 = vadd.f32 %v423, %v431
    %v434 = vtanh.pop %v433
    %436 = vrot.lane.b32.xlu0 %v434, 32
    %v437 = vpop.permute.xlu0 %436
    %v439 = vmul.f32 %v418, %v437
    %441 = vrot.lane.b32.xlu0 %v439, 64
    %v442 = vpop.permute.xlu0 %441
    %vm444 = vcmask 259076
    %445 = vst.msk [vmem:[#allocation2] sm:$0x30] %vm444, %v442
    %v446 = vpack.c.bf16 %v439, %v439
    %v448 = vrot.slane %v446, 2
    %449 = vrot.lane.b32.xlu0 %v448, 64
    %v450 = vpop.permute.xlu0 %449
    %v452 = vsel %vm202, %v450, 0
    %454 = vmatprep.subr.bf16.mxu0 0
    %455 = vmatpush1.bf16.msra.mxu0 0
    %456 = vmatprep.subr.bf16.mxu0 0
    %457 = vmatpush1.bf16.msra.mxu0 0
    %458 = vmatprep.subr.bf16.mxu0 0
    %459 = vmatpush1.bf16.msra.mxu0 0
    %460 = vmatprep.subr.bf16.mxu0 0
    %461 = vmatpush1.bf16.msra.mxu0 0
    %462 = vmatprep.subr.bf16.mxu0 0
    %463 = vmatpush1.bf16.msra.mxu0 0
    %464 = vmatprep.subr.bf16.mxu0 0
    %465 = vmatpush1.bf16.msra.mxu0 0
    %466 = vmatprep.subr.bf16.mxu0 0
    %467 = vmatpush1.bf16.msra.mxu0 %v199
    %468 = vmatprep.subr.bf16.mxu0 0
    %469 = vmatpush1.bf16.msra.mxu0 %v198
    %470 = vmatprep.subr.bf16.mxu0 0
    %471 = vmatpush2.bf16.msra.mxu0 0
    %472 = vmatprep.subr.bf16.mxu0 0
    %473 = vmatpush2.bf16.msra.mxu0 0
    %474 = vmatprep.subr.bf16.mxu0 0
    %475 = vmatpush2.bf16.msra.mxu0 0
    %476 = vmatprep.subr.bf16.mxu0 0
    %477 = vmatpush2.bf16.msra.mxu0 0
    %478 = vmatprep.subr.bf16.mxu0 0
    %479 = vmatpush2.bf16.msra.mxu0 0
    %480 = vmatprep.subr.bf16.mxu0 0
    %481 = vmatpush2.bf16.msra.mxu0 0
    %482 = vmatprep.subr.bf16.mxu0 0
    %483 = vmatpush2.bf16.msra.mxu0 0
    %484 = vmatprep.subr.bf16.mxu0 0
    %485 = vmatpush2.bf16.msra.mxu0 0
    %486 = vmatprep.mubr.bf16.mxu0 0
    %487 = vmatmul.mubr.bf16.gmra.mxu0 %v452
    %v488 = vpop.f32.mrf.mxu0
    %v489 = vadd.f32 0.0, %v488
    %v490 = vpop.f32.mrf.mxu0
    %v491 = vpop.f32.mrf.mxu0
    %v492 = vpop.f32.mrf.mxu0
    %493 = vdwg.mxu0
    %v495 = vrot.slane %v489, 2
    %v497 = vadd.f32 %v180, %v495
    %v498 = vxor.u32 %v497, 2147483648
    %v499 = vmul.f32 %v498, 1.442695
    %v500 = vpow.pop %v499
    %v501 = vadd.f32 %v500, 1.0
    %v502 = vrcp.pop %v501
    %v503 = vmul.f32 1.0, %v502
    %v504 = vtanh.pop %v497
    %v506 = vrot.slane %v433, 6
    %v508 = vmul.f32 %v503, %v506
    %510 = vrot.lane.b32.xlu0 %v504, 32
    %v511 = vpop.permute.xlu0 %510
    %v513 = vmul.f32 %v503, %v511
    %515 = vrot.lane.b32.xlu0 %v513, 32
    %v516 = vpop.permute.xlu0 %515
    %v518 = vadd.f32 %v508, %v516
    %v519 = vtanh.pop %v518
    %521 = vrot.lane.b32.xlu0 %v519, 32
    %v522 = vpop.permute.xlu0 %521
    %v524 = vmul.f32 %v503, %v522
    %526 = vrot.lane.b32.xlu0 %v524, 64
    %v527 = vpop.permute.xlu0 %526
    %vm529 = vcmask 261126
    %530 = vst.msk [vmem:[#allocation2] sm:$0xc0] %vm529, %v527
    %v531 = vpack.c.bf16 %v524, %v524
    %v533 = vrot.slane %v531, 3
    %534 = vrot.lane.b32.xlu0 %v533, 64
    %v535 = vpop.permute.xlu0 %534
    %v537 = vsel %vm202, %v535, 0
    %539 = vmatprep.subr.bf16.mxu0 0
    %540 = vmatpush1.bf16.msra.mxu0 0
    %541 = vmatprep.subr.bf16.mxu0 0
    %542 = vmatpush1.bf16.msra.mxu0 0
    %543 = vmatprep.subr.bf16.mxu0 0
    %544 = vmatpush1.bf16.msra.mxu0 0
    %545 = vmatprep.subr.bf16.mxu0 0
    %546 = vmatpush1.bf16.msra.mxu0 0
    %547 = vmatprep.subr.bf16.mxu0 0
    %548 = vmatpush1.bf16.msra.mxu0 0
    %549 = vmatprep.subr.bf16.mxu0 0
    %550 = vmatpush1.bf16.msra.mxu0 0
    %551 = vmatprep.subr.bf16.mxu0 0
    %552 = vmatpush1.bf16.msra.mxu0 %v199
    %553 = vmatprep.subr.bf16.mxu0 0
    %554 = vmatpush1.bf16.msra.mxu0 %v198
    %555 = vmatprep.subr.bf16.mxu0 0
    %556 = vmatpush2.bf16.msra.mxu0 0
    %557 = vmatprep.subr.bf16.mxu0 0
    %558 = vmatpush2.bf16.msra.mxu0 0
    %559 = vmatprep.subr.bf16.mxu0 0
    %560 = vmatpush2.bf16.msra.mxu0 0
    %561 = vmatprep.subr.bf16.mxu0 0
    %562 = vmatpush2.bf16.msra.mxu0 0
    %563 = vmatprep.subr.bf16.mxu0 0
    %564 = vmatpush2.bf16.msra.mxu0 0
    %565 = vmatprep.subr.bf16.mxu0 0
    %566 = vmatpush2.bf16.msra.mxu0 0
    %567 = vmatprep.subr.bf16.mxu0 0
    %568 = vmatpush2.bf16.msra.mxu0 0
    %569 = vmatprep.subr.bf16.mxu0 0
    %570 = vmatpush2.bf16.msra.mxu0 0
    %571 = vmatprep.mubr.bf16.mxu0 0
    %572 = vmatmul.mubr.bf16.gmra.mxu0 %v537
    %v573 = vpop.f32.mrf.mxu0
    %v574 = vadd.f32 0.0, %v573
    %v575 = vpop.f32.mrf.mxu0
    %v576 = vpop.f32.mrf.mxu0
    %v577 = vpop.f32.mrf.mxu0
    %578 = vdwg.mxu0
    %v579 = vadd.f32 %v183, %v574
    %v580 = vxor.u32 %v579, 2147483648
    %v581 = vmul.f32 %v580, 1.442695
    %v582 = vpow.pop %v581
    %v583 = vadd.f32 %v582, 1.0
    %v584 = vrcp.pop %v583
    %v585 = vmul.f32 1.0, %v584
    %v586 = vtanh.pop %v579
    %v588 = vrot.slane %v518, 6
    %v590 = vmul.f32 %v585, %v588
    %592 = vrot.lane.b32.xlu0 %v586, 32
    %v593 = vpop.permute.xlu0 %592
    %v595 = vmul.f32 %v585, %v593
    %597 = vrot.lane.b32.xlu0 %v595, 32
    %v598 = vpop.permute.xlu0 %597
    %v600 = vadd.f32 %v590, %v598
    %v601 = vtanh.pop %v600
    %603 = vrot.lane.b32.xlu0 %v601, 32
    %v604 = vpop.permute.xlu0 %603
    %v606 = vmul.f32 %v585, %v604
    %608 = vrot.lane.b32.xlu0 %v606, 64
    %v609 = vpop.permute.xlu0 %608
    %611 = vst.msk [vmem:[#allocation2 + $0x8] sm:$0x3] %vm275, %v609
    %v612 = vpack.c.bf16 %v606, %v606
    %614 = vrot.lane.b32.xlu0 %v612, 64
    %v615 = vpop.permute.xlu0 %614
    %v617 = vsel %vm202, %v615, 0
    %619 = vmatprep.subr.bf16.mxu0 0
    %620 = vmatpush1.bf16.msra.mxu0 0
    %621 = vmatprep.subr.bf16.mxu0 0
    %622 = vmatpush1.bf16.msra.mxu0 0
    %623 = vmatprep.subr.bf16.mxu0 0
    %624 = vmatpush1.bf16.msra.mxu0 0
    %625 = vmatprep.subr.bf16.mxu0 0
    %626 = vmatpush1.bf16.msra.mxu0 0
    %627 = vmatprep.subr.bf16.mxu0 0
    %628 = vmatpush1.bf16.msra.mxu0 0
    %629 = vmatprep.subr.bf16.mxu0 0
    %630 = vmatpush1.bf16.msra.mxu0 0
    %631 = vmatprep.subr.bf16.mxu0 0
    %632 = vmatpush1.bf16.msra.mxu0 %v199
    %633 = vmatprep.subr.bf16.mxu0 0
    %634 = vmatpush1.bf16.msra.mxu0 %v198
    %635 = vmatprep.subr.bf16.mxu0 0
    %636 = vmatpush2.bf16.msra.mxu0 0
    %637 = vmatprep.subr.bf16.mxu0 0
    %638 = vmatpush2.bf16.msra.mxu0 0
    %639 = vmatprep.subr.bf16.mxu0 0
    %640 = vmatpush2.bf16.msra.mxu0 0
    %641 = vmatprep.subr.bf16.mxu0 0
    %642 = vmatpush2.bf16.msra.mxu0 0
    %643 = vmatprep.subr.bf16.mxu0 0
    %644 = vmatpush2.bf16.msra.mxu0 0
    %645 = vmatprep.subr.bf16.mxu0 0
    %646 = vmatpush2.bf16.msra.mxu0 0
    %647 = vmatprep.subr.bf16.mxu0 0
    %648 = vmatpush2.bf16.msra.mxu0 0
    %649 = vmatprep.subr.bf16.mxu0 0
    %650 = vmatpush2.bf16.msra.mxu0 0
    %651 = vmatprep.mubr.bf16.mxu0 0
    %652 = vmatmul.mubr.bf16.gmra.mxu0 %v617
    %v653 = vpop.f32.mrf.mxu0
    %v654 = vadd.f32 0.0, %v653
    %v655 = vpop.f32.mrf.mxu0
    %v656 = vpop.f32.mrf.mxu0
    %v657 = vpop.f32.mrf.mxu0
    %658 = vdwg.mxu0
    %v660 = vrot.slane %v654, 6
    %v662 = vadd.f32 %v183, %v660
    %v663 = vxor.u32 %v662, 2147483648
    %v664 = vmul.f32 %v663, 1.442695
    %v665 = vpow.pop %v664
    %v666 = vadd.f32 %v665, 1.0
    %v667 = vrcp.pop %v666
    %v668 = vmul.f32 1.0, %v667
    %v669 = vtanh.pop %v662
    %v671 = vrot.slane %v600, 6
    %v673 = vmul.f32 %v668, %v671
    %675 = vrot.lane.b32.xlu0 %v669, 32
    %v676 = vpop.permute.xlu0 %675
    %v678 = vmul.f32 %v668, %v676
    %680 = vrot.lane.b32.xlu0 %v678, 32
    %v681 = vpop.permute.xlu0 %680
    %v683 = vadd.f32 %v673, %v681
    %v684 = vtanh.pop %v683
    %686 = vrot.lane.b32.xlu0 %v684, 32
    %v687 = vpop.permute.xlu0 %686
    %v689 = vmul.f32 %v668, %v687
    %691 = vrot.lane.b32.xlu0 %v689, 64
    %v692 = vpop.permute.xlu0 %691
    %694 = vst.msk [vmem:[#allocation2 + $0x8] sm:$0xc] %vm359, %v692
    %v695 = vpack.c.bf16 %v689, %v689
    %v697 = vrot.slane %v695, 1
    %698 = vrot.lane.b32.xlu0 %v697, 64
    %v699 = vpop.permute.xlu0 %698
    %v701 = vsel %vm202, %v699, 0
    %703 = vmatprep.subr.bf16.mxu0 0
    %704 = vmatpush1.bf16.msra.mxu0 0
    %705 = vmatprep.subr.bf16.mxu0 0
    %706 = vmatpush1.bf16.msra.mxu0 0
    %707 = vmatprep.subr.bf16.mxu0 0
    %708 = vmatpush1.bf16.msra.mxu0 0
    %709 = vmatprep.subr.bf16.mxu0 0
    %710 = vmatpush1.bf16.msra.mxu0 0
    %711 = vmatprep.subr.bf16.mxu0 0
    %712 = vmatpush1.bf16.msra.mxu0 0
    %713 = vmatprep.subr.bf16.mxu0 0
    %714 = vmatpush1.bf16.msra.mxu0 0
    %715 = vmatprep.subr.bf16.mxu0 0
    %716 = vmatpush1.bf16.msra.mxu0 %v199
    %717 = vmatprep.subr.bf16.mxu0 0
    %718 = vmatpush1.bf16.msra.mxu0 %v198
    %719 = vmatprep.subr.bf16.mxu0 0
    %720 = vmatpush2.bf16.msra.mxu0 0
    %721 = vmatprep.subr.bf16.mxu0 0
    %722 = vmatpush2.bf16.msra.mxu0 0
    %723 = vmatprep.subr.bf16.mxu0 0
    %724 = vmatpush2.bf16.msra.mxu0 0
    %725 = vmatprep.subr.bf16.mxu0 0
    %726 = vmatpush2.bf16.msra.mxu0 0
    %727 = vmatprep.subr.bf16.mxu0 0
    %728 = vmatpush2.bf16.msra.mxu0 0
    %729 = vmatprep.subr.bf16.mxu0 0
    %730 = vmatpush2.bf16.msra.mxu0 0
    %731 = vmatprep.subr.bf16.mxu0 0
    %732 = vmatpush2.bf16.msra.mxu0 0
    %733 = vmatprep.subr.bf16.mxu0 0
    %734 = vmatpush2.bf16.msra.mxu0 0
    %735 = vmatprep.mubr.bf16.mxu0 0
    %736 = vmatmul.mubr.bf16.gmra.mxu0 %v701
    %v737 = vpop.f32.mrf.mxu0
    %v738 = vadd.f32 0.0, %v737
    %v739 = vpop.f32.mrf.mxu0
    %v740 = vpop.f32.mrf.mxu0
    %v741 = vpop.f32.mrf.mxu0
    %742 = vdwg.mxu0
    %v744 = vrot.slane %v738, 4
    %v746 = vadd.f32 %v183, %v744
    %v747 = vxor.u32 %v746, 2147483648
    %v748 = vmul.f32 %v747, 1.442695
    %v749 = vpow.pop %v748
    %v750 = vadd.f32 %v749, 1.0
    %v751 = vrcp.pop %v750
    %v752 = vmul.f32 1.0, %v751
    %v753 = vtanh.pop %v746
    %v755 = vrot.slane %v683, 6
    %v757 = vmul.f32 %v752, %v755
    %759 = vrot.lane.b32.xlu0 %v753, 32
    %v760 = vpop.permute.xlu0 %759
    %v762 = vmul.f32 %v752, %v760
    %764 = vrot.lane.b32.xlu0 %v762, 32
    %v765 = vpop.permute.xlu0 %764
    %v767 = vadd.f32 %v757, %v765
    %v768 = vtanh.pop %v767
    %770 = vrot.lane.b32.xlu0 %v768, 32
    %v771 = vpop.permute.xlu0 %770
    %v773 = vmul.f32 %v752, %v771
    %775 = vrot.lane.b32.xlu0 %v773, 64
    %v776 = vpop.permute.xlu0 %775
    %778 = vst.msk [vmem:[#allocation2 + $0x8] sm:$0x30] %vm444, %v776
    %v779 = vpack.c.bf16 %v773, %v773
    %v781 = vrot.slane %v779, 2
    %782 = vrot.lane.b32.xlu0 %v781, 64
    %v783 = vpop.permute.xlu0 %782
    %v785 = vsel %vm202, %v783, 0
    %787 = vmatprep.subr.bf16.mxu0 0
    %788 = vmatpush1.bf16.msra.mxu0 0
    %789 = vmatprep.subr.bf16.mxu0 0
    %790 = vmatpush1.bf16.msra.mxu0 0
    %791 = vmatprep.subr.bf16.mxu0 0
    %792 = vmatpush1.bf16.msra.mxu0 0
    %793 = vmatprep.subr.bf16.mxu0 0
    %794 = vmatpush1.bf16.msra.mxu0 0
    %795 = vmatprep.subr.bf16.mxu0 0
    %796 = vmatpush1.bf16.msra.mxu0 0
    %797 = vmatprep.subr.bf16.mxu0 0
    %798 = vmatpush1.bf16.msra.mxu0 0
    %799 = vmatprep.subr.bf16.mxu0 0
    %800 = vmatpush1.bf16.msra.mxu0 %v199
    %801 = vmatprep.subr.bf16.mxu0 0
    %802 = vmatpush1.bf16.msra.mxu0 %v198
    %803 = vmatprep.subr.bf16.mxu0 0
    %804 = vmatpush2.bf16.msra.mxu0 0
    %805 = vmatprep.subr.bf16.mxu0 0
    %806 = vmatpush2.bf16.msra.mxu0 0
    %807 = vmatprep.subr.bf16.mxu0 0
    %808 = vmatpush2.bf16.msra.mxu0 0
    %809 = vmatprep.subr.bf16.mxu0 0
    %810 = vmatpush2.bf16.msra.mxu0 0
    %811 = vmatprep.subr.bf16.mxu0 0
    %812 = vmatpush2.bf16.msra.mxu0 0
    %813 = vmatprep.subr.bf16.mxu0 0
    %814 = vmatpush2.bf16.msra.mxu0 0
    %815 = vmatprep.subr.bf16.mxu0 0
    %816 = vmatpush2.bf16.msra.mxu0 0
    %817 = vmatprep.subr.bf16.mxu0 0
    %818 = vmatpush2.bf16.msra.mxu0 0
    %819 = vmatprep.mubr.bf16.mxu0 0
    %820 = vmatmul.mubr.bf16.gmra.mxu0 %v785
    %v821 = vpop.f32.mrf.mxu0
    %v822 = vadd.f32 0.0, %v821
    %v823 = vpop.f32.mrf.mxu0
    %v824 = vpop.f32.mrf.mxu0
    %v825 = vpop.f32.mrf.mxu0
    %826 = vdwg.mxu0
    %v828 = vrot.slane %v822, 2
    %v830 = vadd.f32 %v183, %v828
    %v831 = vxor.u32 %v830, 2147483648
    %v832 = vmul.f32 %v831, 1.442695
    %v833 = vpow.pop %v832
    %v834 = vadd.f32 %v833, 1.0
    %v835 = vrcp.pop %v834
    %v836 = vmul.f32 1.0, %v835
    %v837 = vtanh.pop %v830
    %v839 = vrot.slane %v767, 6
    %v841 = vmul.f32 %v836, %v839
    %843 = vrot.lane.b32.xlu0 %v837, 32
    %v844 = vpop.permute.xlu0 %843
    %v846 = vmul.f32 %v836, %v844
    %848 = vrot.lane.b32.xlu0 %v846, 32
    %v849 = vpop.permute.xlu0 %848
    %v851 = vadd.f32 %v841, %v849
    %v852 = vtanh.pop %v851
    %854 = vrot.lane.b32.xlu0 %v852, 32
    %v855 = vpop.permute.xlu0 %854
    %v857 = vmul.f32 %v836, %v855
    %859 = vrot.lane.b32.xlu0 %v857, 64
    %v860 = vpop.permute.xlu0 %859
    %862 = vst.msk [vmem:[#allocation2 + $0x8] sm:$0xc0] %vm529, %v860
    %863 = vst.msk [vmem:[#allocation15 - $0x6] sm:$0xc0] %vm529, %v860
    %v864 = vld [vmem:[#allocation2] sm:$0xff]
    %v865 = vld [vmem:[#allocation2 + $0x8] sm:$0xff]
    %v866 = vpack.c.bf16 %v865, %v864
    %v867 = vld [vmem:[#allocation9] sm:$0xf]
    %v868 = vld [vmem:[#allocation9 + $0x4] sm:$0xf]
    %v869 = vld [vmem:[#allocation9 + $0x8] sm:$0xf]
    %v870 = vld [vmem:[#allocation9 + $0xc] sm:$0xf]
    %v871 = vld [vmem:[%s6] sm:$0x1]
    %v873 = vlaneseq
    %v874 = vshrl.u32 %v873, 7
    %v875 = vsub.s32 0, %v874
    %v876 = vrot.slane %v871, %v875
    %v882 = vunpack.c.l.b16 %v867
    %v883 = vunpack.c.l.b16 %v868
    %v884 = vunpack.c.l.b16 %v869
    %v885 = vunpack.c.l.b16 %v870
    %v886 = vpack.c.b16 %v883, %v882
    %v887 = vpack.c.b16 %v885, %v884
    %v891 = vsel %vm202, %v866, 0
    %893 = vmatprep.subr.bf16.mxu0 0
    %894 = vmatpush1.bf16.msra.mxu0 0
    %895 = vmatprep.subr.bf16.mxu0 0
    %896 = vmatpush1.bf16.msra.mxu0 0
    %897 = vmatprep.subr.bf16.mxu0 0
    %898 = vmatpush1.bf16.msra.mxu0 0
    %899 = vmatprep.subr.bf16.mxu0 0
    %900 = vmatpush1.bf16.msra.mxu0 0
    %901 = vmatprep.subr.bf16.mxu0 0
    %902 = vmatpush1.bf16.msra.mxu0 0
    %903 = vmatprep.subr.bf16.mxu0 0
    %904 = vmatpush1.bf16.msra.mxu0 0
    %905 = vmatprep.subr.bf16.mxu0 0
    %906 = vmatpush1.bf16.msra.mxu0 %v887
    %907 = vmatprep.subr.bf16.mxu0 0
    %908 = vmatpush1.bf16.msra.mxu0 %v886
    %909 = vmatprep.subr.bf16.mxu0 0
    %910 = vmatpush2.bf16.msra.mxu0 0
    %911 = vmatprep.subr.bf16.mxu0 0
    %912 = vmatpush2.bf16.msra.mxu0 0
    %913 = vmatprep.subr.bf16.mxu0 0
    %914 = vmatpush2.bf16.msra.mxu0 0
    %915 = vmatprep.subr.bf16.mxu0 0
    %916 = vmatpush2.bf16.msra.mxu0 0
    %917 = vmatprep.subr.bf16.mxu0 0
    %918 = vmatpush2.bf16.msra.mxu0 0
    %919 = vmatprep.subr.bf16.mxu0 0
    %920 = vmatpush2.bf16.msra.mxu0 0
    %921 = vmatprep.subr.bf16.mxu0 0
    %922 = vmatpush2.bf16.msra.mxu0 0
    %923 = vmatprep.subr.bf16.mxu0 0
    %924 = vmatpush2.bf16.msra.mxu0 0
    %925 = vmatprep.mubr.bf16.mxu0 0
    %926 = vmatmul.mubr.bf16.gmra.mxu0 %v891
    %v927 = vpop.f32.mrf.mxu0
    %v928 = vadd.f32 %v876, %v927
    %v929 = vpop.f32.mrf.mxu0
    %v930 = vpop.f32.mrf.mxu0
    %v931 = vadd.f32 %v876, %v930
    %v932 = vpop.f32.mrf.mxu0
    %933 = vdwg.mxu0
    %v934 = vld [vmem:[#allocation11] sm:$0xf]
    %v935 = vld [vmem:[#allocation11 + $0x4] sm:$0xf]
    %v936 = vld [vmem:[#allocation11 + $0x8] sm:$0xf]
    %v937 = vld [vmem:[#allocation11 + $0xc] sm:$0xf]
    %v942 = vunpack.c.l.b16 %v934
    %v943 = vunpack.c.l.b16 %v935
    %v944 = vunpack.c.l.b16 %v936
    %v945 = vunpack.c.l.b16 %v937
    %v946 = vpack.c.b16 %v943, %v942
    %v947 = vpack.c.b16 %v945, %v944
    %950 = vmatprep.subr.bf16.mxu0 0
    %951 = vmatpush1.bf16.msra.mxu0 0
    %952 = vmatprep.subr.bf16.mxu0 0
    %953 = vmatpush1.bf16.msra.mxu0 0
    %954 = vmatprep.subr.bf16.mxu0 0
    %955 = vmatpush1.bf16.msra.mxu0 0
    %956 = vmatprep.subr.bf16.mxu0 0
    %957 = vmatpush1.bf16.msra.mxu0 0
    %958 = vmatprep.subr.bf16.mxu0 0
    %959 = vmatpush1.bf16.msra.mxu0 0
    %960 = vmatprep.subr.bf16.mxu0 0
    %961 = vmatpush1.bf16.msra.mxu0 0
    %962 = vmatprep.subr.bf16.mxu0 0
    %963 = vmatpush1.bf16.msra.mxu0 %v947
    %964 = vmatprep.subr.bf16.mxu0 0
    %965 = vmatpush1.bf16.msra.mxu0 %v946
    %966 = vmatprep.subr.bf16.mxu0 0
    %967 = vmatpush2.bf16.msra.mxu0 0
    %968 = vmatprep.subr.bf16.mxu0 0
    %969 = vmatpush2.bf16.msra.mxu0 0
    %970 = vmatprep.subr.bf16.mxu0 0
    %971 = vmatpush2.bf16.msra.mxu0 0
    %972 = vmatprep.subr.bf16.mxu0 0
    %973 = vmatpush2.bf16.msra.mxu0 0
    %974 = vmatprep.subr.bf16.mxu0 0
    %975 = vmatpush2.bf16.msra.mxu0 0
    %976 = vmatprep.subr.bf16.mxu0 0
    %977 = vmatpush2.bf16.msra.mxu0 0
    %978 = vmatprep.subr.bf16.mxu0 0
    %979 = vmatpush2.bf16.msra.mxu0 0
    %980 = vmatprep.subr.bf16.mxu0 0
    %981 = vmatpush2.bf16.msra.mxu0 0
    %982 = vmatprep.mubr.bf16.mxu0 0
    %983 = vmatmul.mubr.bf16.gmra.mxu0 %v204
    %v984 = vpop.f32.mrf.mxu0
    %v985 = vadd.f32 0.0, %v984
    %v986 = vpop.f32.mrf.mxu0
    %v987 = vpop.f32.mrf.mxu0
    %v988 = vpop.f32.mrf.mxu0
    %989 = vdwg.mxu0
    %v990 = vadd.f32 %v928, %v985
    %v991 = vxor.u32 %v990, 2147483648
    %v992 = vmul.f32 %v991, 1.442695
    %v993 = vpow.pop %v992
    %v994 = vadd.f32 %v993, 1.0
    %v995 = vrcp.pop %v994
    %v996 = vmul.f32 1.0, %v995
    %v997 = vtanh.pop %v990
    %v998 = vmul.f32 %v996, 0.0
    %1000 = vrot.lane.b32.xlu0 %v997, 32
    %v1001 = vpop.permute.xlu0 %1000
    %v1003 = vmul.f32 %v996, %v1001
    %1005 = vrot.lane.b32.xlu0 %v1003, 32
    %v1006 = vpop.permute.xlu0 %1005
    %v1008 = vadd.f32 %v998, %v1006
    %v1009 = vtanh.pop %v1008
    %1011 = vrot.lane.b32.xlu0 %v1009, 32
    %v1012 = vpop.permute.xlu0 %1011
    %v1014 = vmul.f32 %v996, %v1012
    %v1015 = vpack.c.bf16 %v1014, %v1014
    %1017 = vrot.lane.b32.xlu0 %v1015, 64
    %v1018 = vpop.permute.xlu0 %1017
    %v1020 = vsel %vm202, %v1018, 0
    %1022 = vmatprep.subr.bf16.mxu0 0
    %1023 = vmatpush1.bf16.msra.mxu0 0
    %1024 = vmatprep.subr.bf16.mxu0 0
    %1025 = vmatpush1.bf16.msra.mxu0 0
    %1026 = vmatprep.subr.bf16.mxu0 0
    %1027 = vmatpush1.bf16.msra.mxu0 0
    %1028 = vmatprep.subr.bf16.mxu0 0
    %1029 = vmatpush1.bf16.msra.mxu0 0
    %1030 = vmatprep.subr.bf16.mxu0 0
    %1031 = vmatpush1.bf16.msra.mxu0 0
    %1032 = vmatprep.subr.bf16.mxu0 0
    %1033 = vmatpush1.bf16.msra.mxu0 0
    %1034 = vmatprep.subr.bf16.mxu0 0
    %1035 = vmatpush1.bf16.msra.mxu0 %v947
    %1036 = vmatprep.subr.bf16.mxu0 0
    %1037 = vmatpush1.bf16.msra.mxu0 %v946
    %1038 = vmatprep.subr.bf16.mxu0 0
    %1039 = vmatpush2.bf16.msra.mxu0 0
    %1040 = vmatprep.subr.bf16.mxu0 0
    %1041 = vmatpush2.bf16.msra.mxu0 0
    %1042 = vmatprep.subr.bf16.mxu0 0
    %1043 = vmatpush2.bf16.msra.mxu0 0
    %1044 = vmatprep.subr.bf16.mxu0 0
    %1045 = vmatpush2.bf16.msra.mxu0 0
    %1046 = vmatprep.subr.bf16.mxu0 0
    %1047 = vmatpush2.bf16.msra.mxu0 0
    %1048 = vmatprep.subr.bf16.mxu0 0
    %1049 = vmatpush2.bf16.msra.mxu0 0
    %1050 = vmatprep.subr.bf16.mxu0 0
    %1051 = vmatpush2.bf16.msra.mxu0 0
    %1052 = vmatprep.subr.bf16.mxu0 0
    %1053 = vmatpush2.bf16.msra.mxu0 0
    %1054 = vmatprep.mubr.bf16.mxu0 0
    %1055 = vmatmul.mubr.bf16.gmra.mxu0 %v1020
    %v1056 = vpop.f32.mrf.mxu0
    %v1057 = vadd.f32 0.0, %v1056
    %v1058 = vpop.f32.mrf.mxu0
    %v1059 = vpop.f32.mrf.mxu0
    %v1060 = vpop.f32.mrf.mxu0
    %1061 = vdwg.mxu0
    %v1063 = vrot.slane %v1057, 6
    %v1065 = vadd.f32 %v928, %v1063
    %v1066 = vxor.u32 %v1065, 2147483648
    %v1067 = vmul.f32 %v1066, 1.442695
    %v1068 = vpow.pop %v1067
    %v1069 = vadd.f32 %v1068, 1.0
    %v1070 = vrcp.pop %v1069
    %v1071 = vmul.f32 1.0, %v1070
    %v1072 = vtanh.pop %v1065
    %v1074 = vrot.slane %v1008, 6
    %v1076 = vmul.f32 %v1071, %v1074
    %1078 = vrot.lane.b32.xlu0 %v1072, 32
    %v1079 = vpop.permute.xlu0 %1078
    %v1081 = vmul.f32 %v1071, %v1079
    %1083 = vrot.lane.b32.xlu0 %v1081, 32
    %v1084 = vpop.permute.xlu0 %1083
    %v1086 = vadd.f32 %v1076, %v1084
    %v1087 = vtanh.pop %v1086
    %1089 = vrot.lane.b32.xlu0 %v1087, 32
    %v1090 = vpop.permute.xlu0 %1089
    %v1092 = vmul.f32 %v1071, %v1090
    %v1093 = vpack.c.bf16 %v1092, %v1092
    %v1095 = vrot.slane %v1093, 1
    %1096 = vrot.lane.b32.xlu0 %v1095, 64
    %v1097 = vpop.permute.xlu0 %1096
    %v1099 = vsel %vm202, %v1097, 0
    %1101 = vmatprep.subr.bf16.mxu0 0
    %1102 = vmatpush1.bf16.msra.mxu0 0
    %1103 = vmatprep.subr.bf16.mxu0 0
    %1104 = vmatpush1.bf16.msra.mxu0 0
    %1105 = vmatprep.subr.bf16.mxu0 0
    %1106 = vmatpush1.bf16.msra.mxu0 0
    %1107 = vmatprep.subr.bf16.mxu0 0
    %1108 = vmatpush1.bf16.msra.mxu0 0
    %1109 = vmatprep.subr.bf16.mxu0 0
    %1110 = vmatpush1.bf16.msra.mxu0 0
    %1111 = vmatprep.subr.bf16.mxu0 0
    %1112 = vmatpush1.bf16.msra.mxu0 0
    %1113 = vmatprep.subr.bf16.mxu0 0
    %1114 = vmatpush1.bf16.msra.mxu0 %v947
    %1115 = vmatprep.subr.bf16.mxu0 0
    %1116 = vmatpush1.bf16.msra.mxu0 %v946
    %1117 = vmatprep.subr.bf16.mxu0 0
    %1118 = vmatpush2.bf16.msra.mxu0 0
    %1119 = vmatprep.subr.bf16.mxu0 0
    %1120 = vmatpush2.bf16.msra.mxu0 0
    %1121 = vmatprep.subr.bf16.mxu0 0
    %1122 = vmatpush2.bf16.msra.mxu0 0
    %1123 = vmatprep.subr.bf16.mxu0 0
    %1124 = vmatpush2.bf16.msra.mxu0 0
    %1125 = vmatprep.subr.bf16.mxu0 0
    %1126 = vmatpush2.bf16.msra.mxu0 0
    %1127 = vmatprep.subr.bf16.mxu0 0
    %1128 = vmatpush2.bf16.msra.mxu0 0
    %1129 = vmatprep.subr.bf16.mxu0 0
    %1130 = vmatpush2.bf16.msra.mxu0 0
    %1131 = vmatprep.subr.bf16.mxu0 0
    %1132 = vmatpush2.bf16.msra.mxu0 0
    %1133 = vmatprep.mubr.bf16.mxu0 0
    %1134 = vmatmul.mubr.bf16.gmra.mxu0 %v1099
    %v1135 = vpop.f32.mrf.mxu0
    %v1136 = vadd.f32 0.0, %v1135
    %v1137 = vpop.f32.mrf.mxu0
    %v1138 = vpop.f32.mrf.mxu0
    %v1139 = vpop.f32.mrf.mxu0
    %1140 = vdwg.mxu0
    %v1142 = vrot.slane %v1136, 4
    %v1144 = vadd.f32 %v928, %v1142
    %v1145 = vxor.u32 %v1144, 2147483648
    %v1146 = vmul.f32 %v1145, 1.442695
    %v1147 = vpow.pop %v1146
    %v1148 = vadd.f32 %v1147, 1.0
    %v1149 = vrcp.pop %v1148
    %v1150 = vmul.f32 1.0, %v1149
    %v1151 = vtanh.pop %v1144
    %v1153 = vrot.slane %v1086, 6
    %v1155 = vmul.f32 %v1150, %v1153
    %1157 = vrot.lane.b32.xlu0 %v1151, 32
    %v1158 = vpop.permute.xlu0 %1157
    %v1160 = vmul.f32 %v1150, %v1158
    %1162 = vrot.lane.b32.xlu0 %v1160, 32
    %v1163 = vpop.permute.xlu0 %1162
    %v1165 = vadd.f32 %v1155, %v1163
    %v1166 = vtanh.pop %v1165
    %1168 = vrot.lane.b32.xlu0 %v1166, 32
    %v1169 = vpop.permute.xlu0 %1168
    %v1171 = vmul.f32 %v1150, %v1169
    %v1172 = vpack.c.bf16 %v1171, %v1171
    %v1174 = vrot.slane %v1172, 2
    %1175 = vrot.lane.b32.xlu0 %v1174, 64
    %v1176 = vpop.permute.xlu0 %1175
    %v1178 = vsel %vm202, %v1176, 0
    %1180 = vmatprep.subr.bf16.mxu0 0
    %1181 = vmatpush1.bf16.msra.mxu0 0
    %1182 = vmatprep.subr.bf16.mxu0 0
    %1183 = vmatpush1.bf16.msra.mxu0 0
    %1184 = vmatprep.subr.bf16.mxu0 0
    %1185 = vmatpush1.bf16.msra.mxu0 0
    %1186 = vmatprep.subr.bf16.mxu0 0
    %1187 = vmatpush1.bf16.msra.mxu0 0
    %1188 = vmatprep.subr.bf16.mxu0 0
    %1189 = vmatpush1.bf16.msra.mxu0 0
    %1190 = vmatprep.subr.bf16.mxu0 0
    %1191 = vmatpush1.bf16.msra.mxu0 0
    %1192 = vmatprep.subr.bf16.mxu0 0
    %1193 = vmatpush1.bf16.msra.mxu0 %v947
    %1194 = vmatprep.subr.bf16.mxu0 0
    %1195 = vmatpush1.bf16.msra.mxu0 %v946
    %1196 = vmatprep.subr.bf16.mxu0 0
    %1197 = vmatpush2.bf16.msra.mxu0 0
    %1198 = vmatprep.subr.bf16.mxu0 0
    %1199 = vmatpush2.bf16.msra.mxu0 0
    %1200 = vmatprep.subr.bf16.mxu0 0
    %1201 = vmatpush2.bf16.msra.mxu0 0
    %1202 = vmatprep.subr.bf16.mxu0 0
    %1203 = vmatpush2.bf16.msra.mxu0 0
    %1204 = vmatprep.subr.bf16.mxu0 0
    %1205 = vmatpush2.bf16.msra.mxu0 0
    %1206 = vmatprep.subr.bf16.mxu0 0
    %1207 = vmatpush2.bf16.msra.mxu0 0
    %1208 = vmatprep.subr.bf16.mxu0 0
    %1209 = vmatpush2.bf16.msra.mxu0 0
    %1210 = vmatprep.subr.bf16.mxu0 0
    %1211 = vmatpush2.bf16.msra.mxu0 0
    %1212 = vmatprep.mubr.bf16.mxu0 0
    %1213 = vmatmul.mubr.bf16.gmra.mxu0 %v1178
    %v1214 = vpop.f32.mrf.mxu0
    %v1215 = vadd.f32 0.0, %v1214
    %v1216 = vpop.f32.mrf.mxu0
    %v1217 = vpop.f32.mrf.mxu0
    %v1218 = vpop.f32.mrf.mxu0
    %1219 = vdwg.mxu0
    %v1221 = vrot.slane %v1215, 2
    %v1223 = vadd.f32 %v928, %v1221
    %v1224 = vxor.u32 %v1223, 2147483648
    %v1225 = vmul.f32 %v1224, 1.442695
    %v1226 = vpow.pop %v1225
    %v1227 = vadd.f32 %v1226, 1.0
    %v1228 = vrcp.pop %v1227
    %v1229 = vmul.f32 1.0, %v1228
    %v1230 = vtanh.pop %v1223
    %v1232 = vrot.slane %v1165, 6
    %v1234 = vmul.f32 %v1229, %v1232
    %1236 = vrot.lane.b32.xlu0 %v1230, 32
    %v1237 = vpop.permute.xlu0 %1236
    %v1239 = vmul.f32 %v1229, %v1237
    %1241 = vrot.lane.b32.xlu0 %v1239, 32
    %v1242 = vpop.permute.xlu0 %1241
    %v1244 = vadd.f32 %v1234, %v1242
    %v1245 = vtanh.pop %v1244
    %1247 = vrot.lane.b32.xlu0 %v1245, 32
    %v1248 = vpop.permute.xlu0 %1247
    %v1250 = vmul.f32 %v1229, %v1248
    %v1251 = vpack.c.bf16 %v1250, %v1250
    %v1253 = vrot.slane %v1251, 3
    %1254 = vrot.lane.b32.xlu0 %v1253, 64
    %v1255 = vpop.permute.xlu0 %1254
    %v1257 = vsel %vm202, %v1255, 0
    %1259 = vmatprep.subr.bf16.mxu0 0
    %1260 = vmatpush1.bf16.msra.mxu0 0
    %1261 = vmatprep.subr.bf16.mxu0 0
    %1262 = vmatpush1.bf16.msra.mxu0 0
    %1263 = vmatprep.subr.bf16.mxu0 0
    %1264 = vmatpush1.bf16.msra.mxu0 0
    %1265 = vmatprep.subr.bf16.mxu0 0
    %1266 = vmatpush1.bf16.msra.mxu0 0
    %1267 = vmatprep.subr.bf16.mxu0 0
    %1268 = vmatpush1.bf16.msra.mxu0 0
    %1269 = vmatprep.subr.bf16.mxu0 0
    %1270 = vmatpush1.bf16.msra.mxu0 0
    %1271 = vmatprep.subr.bf16.mxu0 0
    %1272 = vmatpush1.bf16.msra.mxu0 %v947
    %1273 = vmatprep.subr.bf16.mxu0 0
    %1274 = vmatpush1.bf16.msra.mxu0 %v946
    %1275 = vmatprep.subr.bf16.mxu0 0
    %1276 = vmatpush2.bf16.msra.mxu0 0
    %1277 = vmatprep.subr.bf16.mxu0 0
    %1278 = vmatpush2.bf16.msra.mxu0 0
    %1279 = vmatprep.subr.bf16.mxu0 0
    %1280 = vmatpush2.bf16.msra.mxu0 0
    %1281 = vmatprep.subr.bf16.mxu0 0
    %1282 = vmatpush2.bf16.msra.mxu0 0
    %1283 = vmatprep.subr.bf16.mxu0 0
    %1284 = vmatpush2.bf16.msra.mxu0 0
    %1285 = vmatprep.subr.bf16.mxu0 0
    %1286 = vmatpush2.bf16.msra.mxu0 0
    %1287 = vmatprep.subr.bf16.mxu0 0
    %1288 = vmatpush2.bf16.msra.mxu0 0
    %1289 = vmatprep.subr.bf16.mxu0 0
    %1290 = vmatpush2.bf16.msra.mxu0 0
    %1291 = vmatprep.mubr.bf16.mxu0 0
    %1292 = vmatmul.mubr.bf16.gmra.mxu0 %v1257
    %v1293 = vpop.f32.mrf.mxu0
    %v1294 = vadd.f32 0.0, %v1293
    %v1295 = vpop.f32.mrf.mxu0
    %v1296 = vpop.f32.mrf.mxu0
    %v1297 = vpop.f32.mrf.mxu0
    %1298 = vdwg.mxu0
    %v1299 = vadd.f32 %v931, %v1294
    %v1300 = vxor.u32 %v1299, 2147483648
    %v1301 = vmul.f32 %v1300, 1.442695
    %v1302 = vpow.pop %v1301
    %v1303 = vadd.f32 %v1302, 1.0
    %v1304 = vrcp.pop %v1303
    %v1305 = vmul.f32 1.0, %v1304
    %v1306 = vtanh.pop %v1299
    %v1308 = vrot.slane %v1244, 6
    %v1310 = vmul.f32 %v1305, %v1308
    %1312 = vrot.lane.b32.xlu0 %v1306, 32
    %v1313 = vpop.permute.xlu0 %1312
    %v1315 = vmul.f32 %v1305, %v1313
    %1317 = vrot.lane.b32.xlu0 %v1315, 32
    %v1318 = vpop.permute.xlu0 %1317
    %v1320 = vadd.f32 %v1310, %v1318
    %v1321 = vtanh.pop %v1320
    %1323 = vrot.lane.b32.xlu0 %v1321, 32
    %v1324 = vpop.permute.xlu0 %1323
    %v1326 = vmul.f32 %v1305, %v1324
    %v1327 = vpack.c.bf16 %v1326, %v1326
    %1329 = vrot.lane.b32.xlu0 %v1327, 64
    %v1330 = vpop.permute.xlu0 %1329
    %v1332 = vsel %vm202, %v1330, 0
    %1334 = vmatprep.subr.bf16.mxu0 0
    %1335 = vmatpush1.bf16.msra.mxu0 0
    %1336 = vmatprep.subr.bf16.mxu0 0
    %1337 = vmatpush1.bf16.msra.mxu0 0
    %1338 = vmatprep.subr.bf16.mxu0 0
    %1339 = vmatpush1.bf16.msra.mxu0 0
    %1340 = vmatprep.subr.bf16.mxu0 0
    %1341 = vmatpush1.bf16.msra.mxu0 0
    %1342 = vmatprep.subr.bf16.mxu0 0
    %1343 = vmatpush1.bf16.msra.mxu0 0
    %1344 = vmatprep.subr.bf16.mxu0 0
    %1345 = vmatpush1.bf16.msra.mxu0 0
    %1346 = vmatprep.subr.bf16.mxu0 0
    %1347 = vmatpush1.bf16.msra.mxu0 %v947
    %1348 = vmatprep.subr.bf16.mxu0 0
    %1349 = vmatpush1.bf16.msra.mxu0 %v946
    %1350 = vmatprep.subr.bf16.mxu0 0
    %1351 = vmatpush2.bf16.msra.mxu0 0
    %1352 = vmatprep.subr.bf16.mxu0 0
    %1353 = vmatpush2.bf16.msra.mxu0 0
    %1354 = vmatprep.subr.bf16.mxu0 0
    %1355 = vmatpush2.bf16.msra.mxu0 0
    %1356 = vmatprep.subr.bf16.mxu0 0
    %1357 = vmatpush2.bf16.msra.mxu0 0
    %1358 = vmatprep.subr.bf16.mxu0 0
    %1359 = vmatpush2.bf16.msra.mxu0 0
    %1360 = vmatprep.subr.bf16.mxu0 0
    %1361 = vmatpush2.bf16.msra.mxu0 0
    %1362 = vmatprep.subr.bf16.mxu0 0
    %1363 = vmatpush2.bf16.msra.mxu0 0
    %1364 = vmatprep.subr.bf16.mxu0 0
    %1365 = vmatpush2.bf16.msra.mxu0 0
    %1366 = vmatprep.mubr.bf16.mxu0 0
    %1367 = vmatmul.mubr.bf16.gmra.mxu0 %v1332
    %v1368 = vpop.f32.mrf.mxu0
    %v1369 = vadd.f32 0.0, %v1368
    %v1370 = vpop.f32.mrf.mxu0
    %v1371 = vpop.f32.mrf.mxu0
    %v1372 = vpop.f32.mrf.mxu0
    %1373 = vdwg.mxu0
    %v1375 = vrot.slane %v1369, 6
    %v1377 = vadd.f32 %v931, %v1375
    %v1378 = vxor.u32 %v1377, 2147483648
    %v1379 = vmul.f32 %v1378, 1.442695
    %v1380 = vpow.pop %v1379
    %v1381 = vadd.f32 %v1380, 1.0
    %v1382 = vrcp.pop %v1381
    %v1383 = vmul.f32 1.0, %v1382
    %v1384 = vtanh.pop %v1377
    %v1386 = vrot.slane %v1320, 6
    %v1388 = vmul.f32 %v1383, %v1386
    %1390 = vrot.lane.b32.xlu0 %v1384, 32
    %v1391 = vpop.permute.xlu0 %1390
    %v1393 = vmul.f32 %v1383, %v1391
    %1395 = vrot.lane.b32.xlu0 %v1393, 32
    %v1396 = vpop.permute.xlu0 %1395
    %v1398 = vadd.f32 %v1388, %v1396
    %v1399 = vtanh.pop %v1398
    %1401 = vrot.lane.b32.xlu0 %v1399, 32
    %v1402 = vpop.permute.xlu0 %1401
    %v1404 = vmul.f32 %v1383, %v1402
    %v1405 = vpack.c.bf16 %v1404, %v1404
    %v1407 = vrot.slane %v1405, 1
    %1408 = vrot.lane.b32.xlu0 %v1407, 64
    %v1409 = vpop.permute.xlu0 %1408
    %v1411 = vsel %vm202, %v1409, 0
    %1413 = vmatprep.subr.bf16.mxu0 0
    %1414 = vmatpush1.bf16.msra.mxu0 0
    %1415 = vmatprep.subr.bf16.mxu0 0
    %1416 = vmatpush1.bf16.msra.mxu0 0
    %1417 = vmatprep.subr.bf16.mxu0 0
    %1418 = vmatpush1.bf16.msra.mxu0 0
    %1419 = vmatprep.subr.bf16.mxu0 0
    %1420 = vmatpush1.bf16.msra.mxu0 0
    %1421 = vmatprep.subr.bf16.mxu0 0
    %1422 = vmatpush1.bf16.msra.mxu0 0
    %1423 = vmatprep.subr.bf16.mxu0 0
    %1424 = vmatpush1.bf16.msra.mxu0 0
    %1425 = vmatprep.subr.bf16.mxu0 0
    %1426 = vmatpush1.bf16.msra.mxu0 %v947
    %1427 = vmatprep.subr.bf16.mxu0 0
    %1428 = vmatpush1.bf16.msra.mxu0 %v946
    %1429 = vmatprep.subr.bf16.mxu0 0
    %1430 = vmatpush2.bf16.msra.mxu0 0
    %1431 = vmatprep.subr.bf16.mxu0 0
    %1432 = vmatpush2.bf16.msra.mxu0 0
    %1433 = vmatprep.subr.bf16.mxu0 0
    %1434 = vmatpush2.bf16.msra.mxu0 0
    %1435 = vmatprep.subr.bf16.mxu0 0
    %1436 = vmatpush2.bf16.msra.mxu0 0
    %1437 = vmatprep.subr.bf16.mxu0 0
    %1438 = vmatpush2.bf16.msra.mxu0 0
    %1439 = vmatprep.subr.bf16.mxu0 0
    %1440 = vmatpush2.bf16.msra.mxu0 0
    %1441 = vmatprep.subr.bf16.mxu0 0
    %1442 = vmatpush2.bf16.msra.mxu0 0
    %1443 = vmatprep.subr.bf16.mxu0 0
    %1444 = vmatpush2.bf16.msra.mxu0 0
    %1445 = vmatprep.mubr.bf16.mxu0 0
    %1446 = vmatmul.mubr.bf16.gmra.mxu0 %v1411
    %v1447 = vpop.f32.mrf.mxu0
    %v1448 = vadd.f32 0.0, %v1447
    %v1449 = vpop.f32.mrf.mxu0
    %v1450 = vpop.f32.mrf.mxu0
    %v1451 = vpop.f32.mrf.mxu0
    %1452 = vdwg.mxu0
    %v1454 = vrot.slane %v1448, 4
    %v1456 = vadd.f32 %v931, %v1454
    %v1457 = vxor.u32 %v1456, 2147483648
    %v1458 = vmul.f32 %v1457, 1.442695
    %v1459 = vpow.pop %v1458
    %v1460 = vadd.f32 %v1459, 1.0
    %v1461 = vrcp.pop %v1460
    %v1462 = vmul.f32 1.0, %v1461
    %v1463 = vtanh.pop %v1456
    %v1465 = vrot.slane %v1398, 6
    %v1467 = vmul.f32 %v1462, %v1465
    %1469 = vrot.lane.b32.xlu0 %v1463, 32
    %v1470 = vpop.permute.xlu0 %1469
    %v1472 = vmul.f32 %v1462, %v1470
    %1474 = vrot.lane.b32.xlu0 %v1472, 32
    %v1475 = vpop.permute.xlu0 %1474
    %v1477 = vadd.f32 %v1467, %v1475
    %v1478 = vtanh.pop %v1477
    %1480 = vrot.lane.b32.xlu0 %v1478, 32
    %v1481 = vpop.permute.xlu0 %1480
    %v1483 = vmul.f32 %v1462, %v1481
    %v1484 = vpack.c.bf16 %v1483, %v1483
    %v1486 = vrot.slane %v1484, 2
    %1487 = vrot.lane.b32.xlu0 %v1486, 64
    %v1488 = vpop.permute.xlu0 %1487
    %v1490 = vsel %vm202, %v1488, 0
    %1492 = vmatprep.subr.bf16.mxu0 0
    %1493 = vmatpush1.bf16.msra.mxu0 0
    %1494 = vmatprep.subr.bf16.mxu0 0
    %1495 = vmatpush1.bf16.msra.mxu0 0
    %1496 = vmatprep.subr.bf16.mxu0 0
    %1497 = vmatpush1.bf16.msra.mxu0 0
    %1498 = vmatprep.subr.bf16.mxu0 0
    %1499 = vmatpush1.bf16.msra.mxu0 0
    %1500 = vmatprep.subr.bf16.mxu0 0
    %1501 = vmatpush1.bf16.msra.mxu0 0
    %1502 = vmatprep.subr.bf16.mxu0 0
    %1503 = vmatpush1.bf16.msra.mxu0 0
    %1504 = vmatprep.subr.bf16.mxu0 0
    %1505 = vmatpush1.bf16.msra.mxu0 %v947
    %1506 = vmatprep.subr.bf16.mxu0 0
    %1507 = vmatpush1.bf16.msra.mxu0 %v946
    %1508 = vmatprep.subr.bf16.mxu0 0
    %1509 = vmatpush2.bf16.msra.mxu0 0
    %1510 = vmatprep.subr.bf16.mxu0 0
    %1511 = vmatpush2.bf16.msra.mxu0 0
    %1512 = vmatprep.subr.bf16.mxu0 0
    %1513 = vmatpush2.bf16.msra.mxu0 0
    %1514 = vmatprep.subr.bf16.mxu0 0
    %1515 = vmatpush2.bf16.msra.mxu0 0
    %1516 = vmatprep.subr.bf16.mxu0 0
    %1517 = vmatpush2.bf16.msra.mxu0 0
    %1518 = vmatprep.subr.bf16.mxu0 0
    %1519 = vmatpush2.bf16.msra.mxu0 0
    %1520 = vmatprep.subr.bf16.mxu0 0
    %1521 = vmatpush2.bf16.msra.mxu0 0
    %1522 = vmatprep.subr.bf16.mxu0 0
    %1523 = vmatpush2.bf16.msra.mxu0 0
    %1524 = vmatprep.mubr.bf16.mxu0 0
    %1525 = vmatmul.mubr.bf16.gmra.mxu0 %v1490
    %v1526 = vpop.f32.mrf.mxu0
    %v1527 = vadd.f32 0.0, %v1526
    %v1528 = vpop.f32.mrf.mxu0
    %v1529 = vpop.f32.mrf.mxu0
    %v1530 = vpop.f32.mrf.mxu0
    %1531 = vdwg.mxu0
    %v1533 = vrot.slane %v1527, 2
    %v1535 = vadd.f32 %v931, %v1533
    %v1536 = vxor.u32 %v1535, 2147483648
    %v1537 = vmul.f32 %v1536, 1.442695
    %v1538 = vpow.pop %v1537
    %v1539 = vadd.f32 %v1538, 1.0
    %v1540 = vrcp.pop %v1539
    %v1541 = vmul.f32 1.0, %v1540
    %v1542 = vtanh.pop %v1535
    %v1544 = vrot.slane %v1477, 6
    %v1546 = vmul.f32 %v1541, %v1544
    %1548 = vrot.lane.b32.xlu0 %v1542, 32
    %v1549 = vpop.permute.xlu0 %1548
    %v1551 = vmul.f32 %v1541, %v1549
    %1553 = vrot.lane.b32.xlu0 %v1551, 32
    %v1554 = vpop.permute.xlu0 %1553
    %v1556 = vadd.f32 %v1546, %v1554
    %v1557 = vtanh.pop %v1556
    %1559 = vrot.lane.b32.xlu0 %v1557, 32
    %v1560 = vpop.permute.xlu0 %1559
    %v1562 = vmul.f32 %v1541, %v1560
    %1564 = vrot.lane.b32.xlu0 %v1562, 64
    %v1565 = vpop.permute.xlu0 %1564
    %s1567 = scalar_lea.vmem [#allocation15], 2
    %1568 = vst.msk [vmem:[%s1567 - $0x6] sm:$0xc0] %vm529, %v1565
    %v1569 = vld [vmem:[#allocation12] sm:$0xff]
    %v1570 = vld [vmem:[#allocation12 + $0x8] sm:$0xff]
    %v1571 = vld [vmem:[#allocation12 + $0x10] sm:$0xff]
    %v1572 = vld [vmem:[#allocation12 + $0x18] sm:$0xff]
    %v1573 = vld [vmem:[%s8] sm:$0x1]
    %v1575 = vlaneseq
    %v1576 = vshrl.u32 %v1575, 7
    %v1577 = vsub.s32 0, %v1576
    %v1578 = vrot.slane %v1573, %v1577
    %v1580 = vrot.slane %v1562, 6
    %1581 = vrot.lane.b32.xlu0 %v1580, 64
    %v1582 = vpop.permute.xlu0 %1581
    %v1583 = vsel %vm202, %v1582, 0
    %1585 = vmatprep.subr.mxu0 0.0
    %1586 = vmatpush1.msra.mxu0 0.0
    %1587 = vmatprep.subr.mxu0 0.0
    %1588 = vmatpush1.msra.mxu0 0.0
    %1589 = vmatprep.subr.mxu0 0.0
    %1590 = vmatpush1.msra.mxu0 0.0
    %1591 = vmatprep.subr.mxu0 0.0
    %1592 = vmatpush1.msra.mxu0 0.0
    %1593 = vmatprep.subr.mxu0 0.0
    %1594 = vmatpush1.msra.mxu0 0.0
    %1595 = vmatprep.subr.mxu0 0.0
    %1596 = vmatpush1.msra.mxu0 0.0
    %1597 = vmatprep.subr.mxu0 0.0
    %1598 = vmatpush1.msra.mxu0 0.0
    %1599 = vmatprep.subr.mxu0 0.0
    %1600 = vmatpush1.msra.mxu0 0.0
    %1601 = vmatprep.subr.mxu0 0.0
    %1602 = vmatpush1.msra.mxu0 0.0
    %1603 = vmatprep.subr.mxu0 0.0
    %1604 = vmatpush1.msra.mxu0 0.0
    %1605 = vmatprep.subr.mxu0 0.0
    %1606 = vmatpush1.msra.mxu0 0.0
    %1607 = vmatprep.subr.mxu0 0.0
    %1608 = vmatpush1.msra.mxu0 0.0
    %1609 = vmatprep.subr.mxu0 0.0
    %1610 = vmatpush1.msra.mxu0 %v1572
    %1611 = vmatprep.subr.mxu0 0.0
    %1612 = vmatpush1.msra.mxu0 %v1571
    %1613 = vmatprep.subr.mxu0 0.0
    %1614 = vmatpush1.msra.mxu0 %v1570
    %1615 = vmatprep.subr.mxu0 0.0
    %1616 = vmatpush1.msra.mxu0 %v1569
    %1617 = vmatprep.subr.mxu0 0.0
    %1618 = vmatpush2.msra.mxu0 0.0
    %1619 = vmatprep.subr.mxu0 0.0
    %1620 = vmatpush2.msra.mxu0 0.0
    %1621 = vmatprep.subr.mxu0 0.0
    %1622 = vmatpush2.msra.mxu0 0.0
    %1623 = vmatprep.subr.mxu0 0.0
    %1624 = vmatpush2.msra.mxu0 0.0
    %1625 = vmatprep.subr.mxu0 0.0
    %1626 = vmatpush2.msra.mxu0 0.0
    %1627 = vmatprep.subr.mxu0 0.0
    %1628 = vmatpush2.msra.mxu0 0.0
    %1629 = vmatprep.subr.mxu0 0.0
    %1630 = vmatpush2.msra.mxu0 0.0
    %1631 = vmatprep.subr.mxu0 0.0
    %1632 = vmatpush2.msra.mxu0 0.0
    %1633 = vmatprep.subr.mxu0 0.0
    %1634 = vmatpush2.msra.mxu0 0.0
    %1635 = vmatprep.subr.mxu0 0.0
    %1636 = vmatpush2.msra.mxu0 0.0
    %1637 = vmatprep.subr.mxu0 0.0
    %1638 = vmatpush2.msra.mxu0 0.0
    %1639 = vmatprep.subr.mxu0 0.0
    %1640 = vmatpush2.msra.mxu0 0.0
    %1641 = vmatprep.subr.mxu0 0.0
    %1642 = vmatpush2.msra.mxu0 0.0
    %1643 = vmatprep.subr.mxu0 0.0
    %1644 = vmatpush2.msra.mxu0 0.0
    %1645 = vmatprep.subr.mxu0 0.0
    %1646 = vmatpush2.msra.mxu0 0.0
    %1647 = vmatprep.subr.mxu0 0.0
    %1648 = vmatpush2.msra.mxu0 0.0
    %1649 = vmatprep.mubr.f32.mxu0 0.0
    %1650 = vmatmul.mubr.f32.gmra.mxu0 %v1583
    %v1651 = vpop.f32.mrf.mxu0
    %v1652 = vadd.f32 %v1578, %v1651
    %v1653 = vpop.f32.mrf.mxu0
    %1654 = vdwg.mxu0
    %vm1655 = vcmask 1041408
    %v1656 = vsel %vm1655, %v1652, -inf
    %1657 = vmax.xlane.f32.xlu0 %v1656
    %v1658 = vpop.xlane.xlu0 %1657
    %v1659 = vsub.f32 %v1652, %v1658
    %v1660 = vmul.f32 %v1659, 1.442695
    %v1661 = vpow.pop %v1660
    %v1662 = vsel %vm1655, %v1661, 0.0
    %1663 = vadd.xlane.f32.xlu0 %v1662
    %v1664 = vpop.xlane.xlu0 %1663
    %v1665 = vlog2.pop %v1664
    %v1666 = vmul.f32 %v1665, 0.6931472
    %v1667 = vadd.f32 %v1658, %v1666
    %v1668 = vsub.f32 %v1652, %v1667
    %1669 = vst [vmem:[#allocation14] sm:$0x3] %v1668
    // Predicated region
    $region62: #{tpu_custom_call.1} parent=1 // pred_check
      _
    $region63: #{tpu_custom_call.1} parent=1 // pred_check_branch
      %1671 = sbr.rel (0) target = $region65
    $region64: #{tpu_custom_call.1} parent=1 // pred_region
      %s1673 = ssub.s32 32, 32
      %1674 = vsyncadd [#allocation5], %s1673
      %s1676 = sshll.u32 [#allocation14], 4
      %s1677 = int_to_ptr.vmem [resolvable:$true] %s1676
      %1679 = dma.vmem_to_hbm [thread:$0]  %s1677, 32, %s9, [#allocation5]
    $region65: #{tpu_custom_call.1} parent=1 // pred_fallthru
      _
    // Predicated region
    $region66: #{tpu_custom_call.1} parent=1 // pred_check
      _
    $region67: #{tpu_custom_call.1} parent=1 // pred_check_branch
      %1681 = sbr.rel (0) target = $region69
    $region68: #{tpu_custom_call.1} parent=1 // pred_region
      %s1683 = ssub.s32 64, 64
      %1684 = vsyncadd [#allocation16], %s1683
      %s1685 = sshll.u32 [#allocation15], 4
      %s1686 = int_to_ptr.vmem [resolvable:$true] %s1685
      %1691 = dma.vmem_to_hbm [thread:$0]  %s1686, 64, %s10, [#allocation16], 32, 32, 2
    $region69: #{tpu_custom_call.1} parent=1 // pred_fallthru
      _
    // Predicated region
    $region70: #{tpu_custom_call.1} parent=1 // pred_check
      _
    $region71: #{tpu_custom_call.1} parent=1 // pred_check_branch
      %1693 = sbr.rel (0) target = $region73
    $region72: #{tpu_custom_call.1} parent=1 // pred_region
      %1694 = dma.done [#allocation5], 32
    $region73: #{tpu_custom_call.1} parent=1 // pred_fallthru
      _
    // Predicated region
    $region74: #{tpu_custom_call.1} parent=1 // pred_check
      _
    $region75: #{tpu_custom_call.1} parent=1 // pred_check_branch
      %1696 = sbr.rel (0) target = $region77
    $region76: #{tpu_custom_call.1} parent=1 // pred_region
      %1697 = dma.done [#allocation16], 64
    $region77: #{tpu_custom_call.1} parent=1 // pred_fallthru
      _
    %1698 = vsyncpa [#allocation4], 1
    %1699 = vsyncpa [#allocation7], 1
    %1700 = vsyncpa [#allocation10], 1
    %1701 = vsyncpa [#allocation13], 1
    %1702 = vsyncpa [#allocation5], 1
    %1703 = vsyncpa [#allocation16], 1

</llo_original>
